<compile_context>
chip_gen: v7x
topology: tpu7x:2x2x1
jax: 0.10.0
libtpu: 0.0.40
codegen_flags: <defaults>
</compile_context>

<pallas_src>
import functools

import jax
import jax.numpy as jnp
import numpy as np
from jax.experimental import pallas as pl
from jax.experimental.pallas import tpu as pltpu


# --------------------------------------------------------------------------- #
# Kernel: (feature, batch) layout, batch on the 128-lane axis.
# --------------------------------------------------------------------------- #
def _mhsa_kernel(hT_ref, ctxT_ref, win_ref, woc_ref, woh_ref,
                 otilde_ref, oattn_ref, *, num_heads, seq_len, ctx_dim):
    f32 = jnp.float32
    H, S, Dc = num_heads, seq_len, ctx_dim

    hT = hT_ref[...]                                   # (Dq, Bt)   matmul dtype
    ctx_f = ctxT_ref[...].astype(f32)                  # (S*Dc, Bt) f32 VPU math

    # (1) All-head input projection: ONE dense MXU matmul with shared weights.
    tgt = jnp.dot(win_ref[...], hT,
                  preferred_element_type=f32)          # (H*Dc, Bt) f32

    # Row-axis (sublane-tile aligned) views; no lane relayouts anywhere below.
    t_h = [tgt[h * Dc:(h + 1) * Dc, :] for h in range(H)]        # (Dc, Bt)
    c_s = [ctx_f[s * Dc:(s + 1) * Dc, :] for s in range(S)]      # (Dc, Bt)

    # (2) scores[h][s][b] = sum_d tgt[h*Dc+d, b] * ctx[s*Dc+d, b]
    #     VPU multiply + sublane-tree sum; batch stays dense on the lanes.
    scores = [[jnp.sum(t_h[h] * c_s[s], axis=0, keepdims=True)   # (1, Bt)
               for s in range(S)] for h in range(H)]

    # (3) Exact softmax over s for each head (running max / sum over the
    #     statically unrolled s axis; exact reciprocal for PyTorch parity).
    e = [[None] * S for _ in range(H)]
    inv = [None] * H
    for h in range(H):
        m = scores[h][0]
        for s in range(1, S):
            m = jnp.maximum(m, scores[h][s])
        denom = None
        for s in range(S):
            e[h][s] = jnp.exp(scores[h][s] - m)
            denom = e[h][s] if denom is None else denom + e[h][s]
        inv[h] = 1.0 / denom                                     # (1, Bt)

    # output_attn[s, b] = mean over heads of the softmax probabilities.
    attn_rows = []
    for s in range(S):
        a = e[0][s] * inv[0]
        for h in range(1, H):
            a = a + e[h][s] * inv[h]
        attn_rows.append(a * (1.0 / H))                          # (1, Bt)
    oattn_ref[...] = jnp.concatenate(attn_rows, axis=0).astype(oattn_ref.dtype)

    # (4) Weighted context per head: wc[h*Dc+d, b] = sum_s p[h,s,b]*ctx[s*Dc+d,b]
    #     (accumulate unnormalized, scale once by 1/denom per head).
    wc_rows = []
    for h in range(H):
        acc = e[h][0] * c_s[0]                                   # (Dc, Bt)
        for s in range(1, S):
            acc = acc + e[h][s] * c_s[s]
        wc_rows.append(acc * inv[h])
    wcT = jnp.concatenate(wc_rows, axis=0)                       # (H*Dc, Bt) f32
    # Row-axis concat only: the head merge never touches the lane axis.

    # (5) Output projection: two dense MXU matmuls (K = H*Dc and K = Dq).
    pre = jnp.dot(woc_ref[...], wcT.astype(woc_ref.dtype),
                  preferred_element_type=f32)                    # (Dq, Bt)
    pre = pre + jnp.dot(woh_ref[...], hT, preferred_element_type=f32)
    otilde_ref[...] = jnp.tanh(pre).astype(otilde_ref.dtype)


# --------------------------------------------------------------------------- #
# Wrapper: layout plumbing + pallas_call.
# --------------------------------------------------------------------------- #
def _pick_b_tile(B):
    """Lane-dense batch tile: multiple of 128, large enough to amortize the
    ~0.35us/step pipeline overhead, capped for v7x's 64 MiB VMEM, and >= 2
    grid blocks whenever there is enough batch to occupy both v7x TCs."""
    if B <= 256:
        return int(128 * pl.cdiv(B, 128))
    half = 128 * pl.cdiv(pl.cdiv(B, 2), 128)
    return int(min(2048, half))


def multi_head_self_attention(h, context, w_in, w_out, *,
                              matmul_dtype=jnp.bfloat16, b_tile=None):
    """h: (B, Dq); context: (B, S, Dc); w_in: (H, Dq, Dc) (pre-transposed
    nn.Linear weights, target_i = h @ w_in[i]); w_out: (H*Dc + Dq, Dq)
    (pre-transposed, h_tilde = tanh(cat([wc_0..wc_{H-1}, h], 1) @ w_out)).

    matmul_dtype: dtype of the HBM / matmul operands (bf16 halves the dominant
    ctx HBM traffic; MXU-native on v5e/v6e/v7x).  Softmax/exp/tanh and all
    accumulations are f32.  Returns (h_tilde (B, Dq) f32, attn (B, S) f32)."""
    B, Dq = h.shape
    _, S, Dc = context.shape
    H = w_in.shape[0]
    HDc = H * Dc
    assert w_out.shape == (HDc + Dq, Dq)

    if b_tile is None:
        b_tile = _pick_b_tile(B)
    nb = int(pl.cdiv(B, b_tile))
    B_pad = nb * b_tile

    # ---- wrapper-side layout plumbing (one XLA pass; batch -> lane axis) ----
    # Zero-padded rows are benign (scores 0 -> uniform softmax, tanh(0)=0) and
    # are sliced off below.  In a fused model the producer can emit these
    # layouts directly; the one-time transpose is what buys ~10x less
    # in-kernel relayout / cross-lane reduction work.
    pad = B_pad - B
    h_p = jnp.pad(h, ((0, pad), (0, 0))) if pad else h
    c_p = jnp.pad(context, ((0, pad), (0, 0), (0, 0))) if pad else context
    hT = jnp.transpose(h_p.astype(matmul_dtype), (1, 0))                 # (Dq, B_pad)
    ctxT = jnp.transpose(c_p.astype(matmul_dtype),
                         (1, 2, 0)).reshape(S * Dc, B_pad)               # (S*Dc, B_pad)

    # Weights repacked so every head split/merge is a row (sublane) slice.
    w_inT = jnp.transpose(w_in, (0, 2, 1)).reshape(HDc, Dq).astype(matmul_dtype)
    w_ocT = jnp.transpose(w_out[:HDc, :], (1, 0)).astype(matmul_dtype)   # (Dq, H*Dc)
    w_ohT = jnp.transpose(w_out[HDc:, :], (1, 0)).astype(matmul_dtype)   # (Dq, Dq)

    out_shapes = (jax.ShapeDtypeStruct((Dq, B_pad), jnp.float32),        # h_tilde^T
                  jax.ShapeDtypeStruct((S, B_pad), jnp.float32))         # attn^T

    itemsize = jnp.dtype(matmul_dtype).itemsize
    in_blk = (Dq + S * Dc) * b_tile * itemsize
    out_blk = (Dq + S) * b_tile * 4
    w_bytes = (HDc * Dq + Dq * HDc + Dq * Dq) * itemsize
    tmp_blk = (S * Dc + 2 * HDc + 3 * H * S + 2 * Dq) * b_tile * 4       # f32 temps
    vmem_limit = int(min(48 << 20,
                         max(16 << 20,
                             2 * (in_blk + out_blk) + w_bytes + tmp_blk + (4 << 20))))

    cost = pl.CostEstimate(
        flops=int(2 * B_pad * (Dq * HDc + 2 * H * S * Dc + HDc * Dq + Dq * Dq)),
        transcendentals=int(B_pad * (H * S + Dq)),
        bytes_accessed=int((Dq + S * Dc) * B_pad * itemsize + w_bytes
                           + (Dq + S) * B_pad * 4))

    kernel = functools.partial(_mhsa_kernel, num_heads=H, seq_len=S, ctx_dim=Dc)

    htT, attT = pl.pallas_call(
        kernel,
        out_shape=out_shapes,
        grid=(nb,),
        in_specs=[
            pl.BlockSpec((Dq, b_tile), lambda i: (0, i)),
            pl.BlockSpec((S * Dc, b_tile), lambda i: (0, i)),
            # Weights: same block every grid step -> VMEM-resident, no re-DMA.
            pl.BlockSpec((HDc, Dq), lambda i: (0, 0)),
            pl.BlockSpec((Dq, HDc), lambda i: (0, 0)),
            pl.BlockSpec((Dq, Dq), lambda i: (0, 0)),
        ],
        out_specs=(
            pl.BlockSpec((Dq, b_tile), lambda i: (0, i)),
            pl.BlockSpec((S, b_tile), lambda i: (0, i)),
        ),
        compiler_params=pltpu.CompilerParams(
            dimension_semantics=("parallel",),     # batch blocks shard across v7x TCs
            vmem_limit_bytes=vmem_limit),
        cost_estimate=cost,
    )(hT, ctxT, w_inT, w_ocT, w_ohT)

    h_tilde = jnp.transpose(htT, (1, 0))[:B]
    attn = jnp.transpose(attT, (1, 0))[:B]
    return h_tilde, attn


# --------------------------------------------------------------------------- #
# Pure-JAX reference mirroring the PyTorch forward (mask=None).
# --------------------------------------------------------------------------- #
def reference(h, context, w_in, w_out):
    H = w_in.shape[0]
    probs, wcs = [], []
    for i in range(H):
        tgt = h @ w_in[i]                                   # (B, Dc)
        scores = jnp.einsum('bsd,bd->bs', context, tgt)     # (B, S)
        p = jax.nn.softmax(scores, axis=-1)
        probs.append(p)
        wcs.append(jnp.einsum('bs,bsd->bd', p, context))
    output_attn = jnp.mean(jnp.stack(probs), axis=0)
    h_tilde = jnp.tanh(jnp.concatenate(wcs + [h], axis=1) @ w_out)
    return h_tilde, output_attn


if __name__ == "__main__":
    num_heads, query_dim, ctx_dim, seq_len = 4, 32, 32, 8

    key = jax.random.PRNGKey(0)
    k_h, k_c, k_wi, k_wo = jax.random.split(key, 4)

    def make_inputs(B):
        h = jax.random.normal(k_h, (B, query_dim), jnp.float32)
        ctx = jax.random.normal(k_c, (B, seq_len, ctx_dim), jnp.float32)
        b_in = 1.0 / np.sqrt(query_dim)
        w_in = jax.random.uniform(k_wi, (num_heads, query_dim, ctx_dim),
                                  jnp.float32, -b_in, b_in)
        in_feat = num_heads * ctx_dim + query_dim
        b_out = 1.0 / np.sqrt(in_feat)
        w_out = jax.random.uniform(k_wo, (in_feat, query_dim),
                                   jnp.float32, -b_out, b_out)
        return h, ctx, w_in, w_out

    def rounded(x, dt):
        return x.astype(dt).astype(jnp.float32)

    def check(B, matmul_dtype, b_tile=None, tol=2e-2):
        h, ctx, w_in, w_out = make_inputs(B)
        ht, attn = multi_head_self_attention(h, ctx, w_in, w_out,
                                             matmul_dtype=matmul_dtype,
                                             b_tile=b_tile)
        jax.block_until_ready((ht, attn))
        # Reference on inputs rounded to the kernel's HBM/matmul dtype, so the
        # check isolates kernel error from intentional input quantization.
        rh, rc, rwi, rwo = (rounded(x, matmul_dtype)
                            for x in (h, ctx, w_in, w_out))
        ref_ht, ref_attn = reference(rh, rc, rwi, rwo)
        assert ht.shape == (B, query_dim) and attn.shape == (B, seq_len)
        assert np.allclose(np.asarray(ht), np.asarray(ref_ht),
                           atol=tol, rtol=tol), \
            f"h_tilde mismatch (B={B}, dtype={matmul_dtype})"
        assert np.allclose(np.asarray(attn), np.asarray(ref_attn),
                           atol=tol, rtol=tol), \
            f"attn mismatch (B={B}, dtype={matmul_dtype})"

    # 1) tiny batch: padded to one lane-dense 128-row tile, bf16 default path.
    check(2, jnp.bfloat16)
    # 2) batch not a multiple of the tile: padding + multi-block parallel grid.
    check(300, jnp.bfloat16)
    # 3) f32 operand path with an explicit tile override.
    check(16, jnp.float32, b_tile=128)

    print("KERNEL_OK")
</pallas_src>

<mosaic_0001>
module attributes {stable_mosaic.version = 11 : i64} {
  func.func @_mhsa_kernel(%arg0: i32, %arg1: memref<32x128xbf16, #tpu.memory_space<vmem>>, %arg2: memref<256x128xbf16, #tpu.memory_space<vmem>>, %arg3: memref<128x32xbf16, #tpu.memory_space<vmem>>, %arg4: memref<32x128xbf16, #tpu.memory_space<vmem>>, %arg5: memref<32x32xbf16, #tpu.memory_space<vmem>>, %arg6: memref<32x128xf32, #tpu.memory_space<vmem>>, %arg7: memref<8x128xf32, #tpu.memory_space<vmem>>) attributes {dimension_semantics = [#tpu.dimension_semantics<parallel>], iteration_bounds = array<i64: 1>, scalar_prefetch = 0 : i64, scratch_operands = 0 : i64, tpu.core_type = #tpu.core_type<tc>, window_params = [{transform_indices = @transform_0, window_bounds = array<i64: 32, 128>}, {transform_indices = @transform_1, window_bounds = array<i64: 256, 128>}, {pipeline_mode = #tpu.pipeline_mode<synchronous>, transform_indices = @transform_2, window_bounds = array<i64: 128, 32>}, {pipeline_mode = #tpu.pipeline_mode<synchronous>, transform_indices = @transform_3, window_bounds = array<i64: 32, 128>}, {pipeline_mode = #tpu.pipeline_mode<synchronous>, transform_indices = @transform_4, window_bounds = array<i64: 32, 32>}, {transform_indices = @transform_5, window_bounds = array<i64: 32, 128>}, {transform_indices = @transform_6, window_bounds = array<i64: 8, 128>}]} {
    %c0 = arith.constant 0 : index
    %c0_0 = arith.constant 0 : index
    %0 = vector.load %arg1[%c0, %c0_0] : memref<32x128xbf16, #tpu.memory_space<vmem>>, vector<32x128xbf16>
    %c0_1 = arith.constant 0 : index
    %c0_2 = arith.constant 0 : index
    %1 = vector.load %arg2[%c0_1, %c0_2] : memref<256x128xbf16, #tpu.memory_space<vmem>>, vector<256x128xbf16>
    %2 = arith.extf %1 : vector<256x128xbf16> to vector<256x128xf32>
    %c0_3 = arith.constant 0 : index
    %c0_4 = arith.constant 0 : index
    %3 = vector.load %arg3[%c0_3, %c0_4] : memref<128x32xbf16, #tpu.memory_space<vmem>>, vector<128x32xbf16>
    %cst = arith.constant dense<0.000000e+00> : vector<128x128xf32>
    %4 = tpu.matmul %3, %0, %cst {dimension_numbers = #tpu.dot_dimension_numbers<[1], [0], [0], [1], [0, 0, 1, 1], [], []>} : vector<128x32xbf16>, vector<32x128xbf16>, vector<128x128xf32> -> vector<128x128xf32>
    %5 = vector.extract_strided_slice %4 {offsets = [0, 0], sizes = [32, 128], strides = [1, 1]} : vector<128x128xf32> to vector<32x128xf32>
    %6 = vector.extract_strided_slice %4 {offsets = [32, 0], sizes = [32, 128], strides = [1, 1]} : vector<128x128xf32> to vector<32x128xf32>
    %7 = vector.extract_strided_slice %4 {offsets = [64, 0], sizes = [32, 128], strides = [1, 1]} : vector<128x128xf32> to vector<32x128xf32>
    %8 = vector.extract_strided_slice %4 {offsets = [96, 0], sizes = [32, 128], strides = [1, 1]} : vector<128x128xf32> to vector<32x128xf32>
    %9 = vector.extract_strided_slice %2 {offsets = [0, 0], sizes = [32, 128], strides = [1, 1]} : vector<256x128xf32> to vector<32x128xf32>
    %10 = vector.extract_strided_slice %2 {offsets = [32, 0], sizes = [32, 128], strides = [1, 1]} : vector<256x128xf32> to vector<32x128xf32>
    %11 = vector.extract_strided_slice %2 {offsets = [64, 0], sizes = [32, 128], strides = [1, 1]} : vector<256x128xf32> to vector<32x128xf32>
    %12 = vector.extract_strided_slice %2 {offsets = [96, 0], sizes = [32, 128], strides = [1, 1]} : vector<256x128xf32> to vector<32x128xf32>
    %13 = vector.extract_strided_slice %2 {offsets = [128, 0], sizes = [32, 128], strides = [1, 1]} : vector<256x128xf32> to vector<32x128xf32>
    %14 = vector.extract_strided_slice %2 {offsets = [160, 0], sizes = [32, 128], strides = [1, 1]} : vector<256x128xf32> to vector<32x128xf32>
    %15 = vector.extract_strided_slice %2 {offsets = [192, 0], sizes = [32, 128], strides = [1, 1]} : vector<256x128xf32> to vector<32x128xf32>
    %16 = vector.extract_strided_slice %2 {offsets = [224, 0], sizes = [32, 128], strides = [1, 1]} : vector<256x128xf32> to vector<32x128xf32>
    %17 = arith.mulf %5, %9 : vector<32x128xf32>
    %cst_5 = arith.constant dense<0.000000e+00> : vector<128xf32>
    %18 = vector.multi_reduction <add>, %17, %cst_5 [0] : vector<32x128xf32> to vector<128xf32>
    %19 = vector.shape_cast %18 : vector<128xf32> to vector<1x128xf32>
    %20 = arith.mulf %5, %10 : vector<32x128xf32>
    %cst_6 = arith.constant dense<0.000000e+00> : vector<128xf32>
    %21 = vector.multi_reduction <add>, %20, %cst_6 [0] : vector<32x128xf32> to vector<128xf32>
    %22 = vector.shape_cast %21 : vector<128xf32> to vector<1x128xf32>
    %23 = arith.mulf %5, %11 : vector<32x128xf32>
    %cst_7 = arith.constant dense<0.000000e+00> : vector<128xf32>
    %24 = vector.multi_reduction <add>, %23, %cst_7 [0] : vector<32x128xf32> to vector<128xf32>
    %25 = vector.shape_cast %24 : vector<128xf32> to vector<1x128xf32>
    %26 = arith.mulf %5, %12 : vector<32x128xf32>
    %cst_8 = arith.constant dense<0.000000e+00> : vector<128xf32>
    %27 = vector.multi_reduction <add>, %26, %cst_8 [0] : vector<32x128xf32> to vector<128xf32>
    %28 = vector.shape_cast %27 : vector<128xf32> to vector<1x128xf32>
    %29 = arith.mulf %5, %13 : vector<32x128xf32>
    %cst_9 = arith.constant dense<0.000000e+00> : vector<128xf32>
    %30 = vector.multi_reduction <add>, %29, %cst_9 [0] : vector<32x128xf32> to vector<128xf32>
    %31 = vector.shape_cast %30 : vector<128xf32> to vector<1x128xf32>
    %32 = arith.mulf %5, %14 : vector<32x128xf32>
    %cst_10 = arith.constant dense<0.000000e+00> : vector<128xf32>
    %33 = vector.multi_reduction <add>, %32, %cst_10 [0] : vector<32x128xf32> to vector<128xf32>
    %34 = vector.shape_cast %33 : vector<128xf32> to vector<1x128xf32>
    %35 = arith.mulf %5, %15 : vector<32x128xf32>
    %cst_11 = arith.constant dense<0.000000e+00> : vector<128xf32>
    %36 = vector.multi_reduction <add>, %35, %cst_11 [0] : vector<32x128xf32> to vector<128xf32>
    %37 = vector.shape_cast %36 : vector<128xf32> to vector<1x128xf32>
    %38 = arith.mulf %5, %16 : vector<32x128xf32>
    %cst_12 = arith.constant dense<0.000000e+00> : vector<128xf32>
    %39 = vector.multi_reduction <add>, %38, %cst_12 [0] : vector<32x128xf32> to vector<128xf32>
    %40 = vector.shape_cast %39 : vector<128xf32> to vector<1x128xf32>
    %41 = arith.mulf %6, %9 : vector<32x128xf32>
    %cst_13 = arith.constant dense<0.000000e+00> : vector<128xf32>
    %42 = vector.multi_reduction <add>, %41, %cst_13 [0] : vector<32x128xf32> to vector<128xf32>
    %43 = vector.shape_cast %42 : vector<128xf32> to vector<1x128xf32>
    %44 = arith.mulf %6, %10 : vector<32x128xf32>
    %cst_14 = arith.constant dense<0.000000e+00> : vector<128xf32>
    %45 = vector.multi_reduction <add>, %44, %cst_14 [0] : vector<32x128xf32> to vector<128xf32>
    %46 = vector.shape_cast %45 : vector<128xf32> to vector<1x128xf32>
    %47 = arith.mulf %6, %11 : vector<32x128xf32>
    %cst_15 = arith.constant dense<0.000000e+00> : vector<128xf32>
    %48 = vector.multi_reduction <add>, %47, %cst_15 [0] : vector<32x128xf32> to vector<128xf32>
    %49 = vector.shape_cast %48 : vector<128xf32> to vector<1x128xf32>
    %50 = arith.mulf %6, %12 : vector<32x128xf32>
    %cst_16 = arith.constant dense<0.000000e+00> : vector<128xf32>
    %51 = vector.multi_reduction <add>, %50, %cst_16 [0] : vector<32x128xf32> to vector<128xf32>
    %52 = vector.shape_cast %51 : vector<128xf32> to vector<1x128xf32>
    %53 = arith.mulf %6, %13 : vector<32x128xf32>
    %cst_17 = arith.constant dense<0.000000e+00> : vector<128xf32>
    %54 = vector.multi_reduction <add>, %53, %cst_17 [0] : vector<32x128xf32> to vector<128xf32>
    %55 = vector.shape_cast %54 : vector<128xf32> to vector<1x128xf32>
    %56 = arith.mulf %6, %14 : vector<32x128xf32>
    %cst_18 = arith.constant dense<0.000000e+00> : vector<128xf32>
    %57 = vector.multi_reduction <add>, %56, %cst_18 [0] : vector<32x128xf32> to vector<128xf32>
    %58 = vector.shape_cast %57 : vector<128xf32> to vector<1x128xf32>
    %59 = arith.mulf %6, %15 : vector<32x128xf32>
    %cst_19 = arith.constant dense<0.000000e+00> : vector<128xf32>
    %60 = vector.multi_reduction <add>, %59, %cst_19 [0] : vector<32x128xf32> to vector<128xf32>
    %61 = vector.shape_cast %60 : vector<128xf32> to vector<1x128xf32>
    %62 = arith.mulf %6, %16 : vector<32x128xf32>
    %cst_20 = arith.constant dense<0.000000e+00> : vector<128xf32>
    %63 = vector.multi_reduction <add>, %62, %cst_20 [0] : vector<32x128xf32> to vector<128xf32>
    %64 = vector.shape_cast %63 : vector<128xf32> to vector<1x128xf32>
    %65 = arith.mulf %7, %9 : vector<32x128xf32>
    %cst_21 = arith.constant dense<0.000000e+00> : vector<128xf32>
    %66 = vector.multi_reduction <add>, %65, %cst_21 [0] : vector<32x128xf32> to vector<128xf32>
    %67 = vector.shape_cast %66 : vector<128xf32> to vector<1x128xf32>
    %68 = arith.mulf %7, %10 : vector<32x128xf32>
    %cst_22 = arith.constant dense<0.000000e+00> : vector<128xf32>
    %69 = vector.multi_reduction <add>, %68, %cst_22 [0] : vector<32x128xf32> to vector<128xf32>
    %70 = vector.shape_cast %69 : vector<128xf32> to vector<1x128xf32>
    %71 = arith.mulf %7, %11 : vector<32x128xf32>
    %cst_23 = arith.constant dense<0.000000e+00> : vector<128xf32>
    %72 = vector.multi_reduction <add>, %71, %cst_23 [0] : vector<32x128xf32> to vector<128xf32>
    %73 = vector.shape_cast %72 : vector<128xf32> to vector<1x128xf32>
    %74 = arith.mulf %7, %12 : vector<32x128xf32>
    %cst_24 = arith.constant dense<0.000000e+00> : vector<128xf32>
    %75 = vector.multi_reduction <add>, %74, %cst_24 [0] : vector<32x128xf32> to vector<128xf32>
    %76 = vector.shape_cast %75 : vector<128xf32> to vector<1x128xf32>
    %77 = arith.mulf %7, %13 : vector<32x128xf32>
    %cst_25 = arith.constant dense<0.000000e+00> : vector<128xf32>
    %78 = vector.multi_reduction <add>, %77, %cst_25 [0] : vector<32x128xf32> to vector<128xf32>
    %79 = vector.shape_cast %78 : vector<128xf32> to vector<1x128xf32>
    %80 = arith.mulf %7, %14 : vector<32x128xf32>
    %cst_26 = arith.constant dense<0.000000e+00> : vector<128xf32>
    %81 = vector.multi_reduction <add>, %80, %cst_26 [0] : vector<32x128xf32> to vector<128xf32>
    %82 = vector.shape_cast %81 : vector<128xf32> to vector<1x128xf32>
    %83 = arith.mulf %7, %15 : vector<32x128xf32>
    %cst_27 = arith.constant dense<0.000000e+00> : vector<128xf32>
    %84 = vector.multi_reduction <add>, %83, %cst_27 [0] : vector<32x128xf32> to vector<128xf32>
    %85 = vector.shape_cast %84 : vector<128xf32> to vector<1x128xf32>
    %86 = arith.mulf %7, %16 : vector<32x128xf32>
    %cst_28 = arith.constant dense<0.000000e+00> : vector<128xf32>
    %87 = vector.multi_reduction <add>, %86, %cst_28 [0] : vector<32x128xf32> to vector<128xf32>
    %88 = vector.shape_cast %87 : vector<128xf32> to vector<1x128xf32>
    %89 = arith.mulf %8, %9 : vector<32x128xf32>
    %cst_29 = arith.constant dense<0.000000e+00> : vector<128xf32>
    %90 = vector.multi_reduction <add>, %89, %cst_29 [0] : vector<32x128xf32> to vector<128xf32>
    %91 = vector.shape_cast %90 : vector<128xf32> to vector<1x128xf32>
    %92 = arith.mulf %8, %10 : vector<32x128xf32>
    %cst_30 = arith.constant dense<0.000000e+00> : vector<128xf32>
    %93 = vector.multi_reduction <add>, %92, %cst_30 [0] : vector<32x128xf32> to vector<128xf32>
    %94 = vector.shape_cast %93 : vector<128xf32> to vector<1x128xf32>
    %95 = arith.mulf %8, %11 : vector<32x128xf32>
    %cst_31 = arith.constant dense<0.000000e+00> : vector<128xf32>
    %96 = vector.multi_reduction <add>, %95, %cst_31 [0] : vector<32x128xf32> to vector<128xf32>
    %97 = vector.shape_cast %96 : vector<128xf32> to vector<1x128xf32>
    %98 = arith.mulf %8, %12 : vector<32x128xf32>
    %cst_32 = arith.constant dense<0.000000e+00> : vector<128xf32>
    %99 = vector.multi_reduction <add>, %98, %cst_32 [0] : vector<32x128xf32> to vector<128xf32>
    %100 = vector.shape_cast %99 : vector<128xf32> to vector<1x128xf32>
    %101 = arith.mulf %8, %13 : vector<32x128xf32>
    %cst_33 = arith.constant dense<0.000000e+00> : vector<128xf32>
    %102 = vector.multi_reduction <add>, %101, %cst_33 [0] : vector<32x128xf32> to vector<128xf32>
    %103 = vector.shape_cast %102 : vector<128xf32> to vector<1x128xf32>
    %104 = arith.mulf %8, %14 : vector<32x128xf32>
    %cst_34 = arith.constant dense<0.000000e+00> : vector<128xf32>
    %105 = vector.multi_reduction <add>, %104, %cst_34 [0] : vector<32x128xf32> to vector<128xf32>
    %106 = vector.shape_cast %105 : vector<128xf32> to vector<1x128xf32>
    %107 = arith.mulf %8, %15 : vector<32x128xf32>
    %cst_35 = arith.constant dense<0.000000e+00> : vector<128xf32>
    %108 = vector.multi_reduction <add>, %107, %cst_35 [0] : vector<32x128xf32> to vector<128xf32>
    %109 = vector.shape_cast %108 : vector<128xf32> to vector<1x128xf32>
    %110 = arith.mulf %8, %16 : vector<32x128xf32>
    %cst_36 = arith.constant dense<0.000000e+00> : vector<128xf32>
    %111 = vector.multi_reduction <add>, %110, %cst_36 [0] : vector<32x128xf32> to vector<128xf32>
    %112 = vector.shape_cast %111 : vector<128xf32> to vector<1x128xf32>
    %113 = arith.maximumf %19, %22 : vector<1x128xf32>
    %114 = arith.maximumf %113, %25 : vector<1x128xf32>
    %115 = arith.maximumf %114, %28 : vector<1x128xf32>
    %116 = arith.maximumf %115, %31 : vector<1x128xf32>
    %117 = arith.maximumf %116, %34 : vector<1x128xf32>
    %118 = arith.maximumf %117, %37 : vector<1x128xf32>
    %119 = arith.maximumf %118, %40 : vector<1x128xf32>
    %120 = arith.subf %19, %119 : vector<1x128xf32>
    %121 = math.exp %120 : vector<1x128xf32>
    %122 = arith.subf %22, %119 : vector<1x128xf32>
    %123 = math.exp %122 : vector<1x128xf32>
    %124 = arith.addf %121, %123 : vector<1x128xf32>
    %125 = arith.subf %25, %119 : vector<1x128xf32>
    %126 = math.exp %125 : vector<1x128xf32>
    %127 = arith.addf %124, %126 : vector<1x128xf32>
    %128 = arith.subf %28, %119 : vector<1x128xf32>
    %129 = math.exp %128 : vector<1x128xf32>
    %130 = arith.addf %127, %129 : vector<1x128xf32>
    %131 = arith.subf %31, %119 : vector<1x128xf32>
    %132 = math.exp %131 : vector<1x128xf32>
    %133 = arith.addf %130, %132 : vector<1x128xf32>
    %134 = arith.subf %34, %119 : vector<1x128xf32>
    %135 = math.exp %134 : vector<1x128xf32>
    %136 = arith.addf %133, %135 : vector<1x128xf32>
    %137 = arith.subf %37, %119 : vector<1x128xf32>
    %138 = math.exp %137 : vector<1x128xf32>
    %139 = arith.addf %136, %138 : vector<1x128xf32>
    %140 = arith.subf %40, %119 : vector<1x128xf32>
    %141 = math.exp %140 : vector<1x128xf32>
    %142 = arith.addf %139, %141 : vector<1x128xf32>
    %cst_37 = arith.constant 1.000000e+00 : f32
    %143 = vector.broadcast %cst_37 : f32 to vector<1x128xf32>
    %144 = arith.divf %143, %142 : vector<1x128xf32>
    %145 = arith.maximumf %43, %46 : vector<1x128xf32>
    %146 = arith.maximumf %145, %49 : vector<1x128xf32>
    %147 = arith.maximumf %146, %52 : vector<1x128xf32>
    %148 = arith.maximumf %147, %55 : vector<1x128xf32>
    %149 = arith.maximumf %148, %58 : vector<1x128xf32>
    %150 = arith.maximumf %149, %61 : vector<1x128xf32>
    %151 = arith.maximumf %150, %64 : vector<1x128xf32>
    %152 = arith.subf %43, %151 : vector<1x128xf32>
    %153 = math.exp %152 : vector<1x128xf32>
    %154 = arith.subf %46, %151 : vector<1x128xf32>
    %155 = math.exp %154 : vector<1x128xf32>
    %156 = arith.addf %153, %155 : vector<1x128xf32>
    %157 = arith.subf %49, %151 : vector<1x128xf32>
    %158 = math.exp %157 : vector<1x128xf32>
    %159 = arith.addf %156, %158 : vector<1x128xf32>
    %160 = arith.subf %52, %151 : vector<1x128xf32>
    %161 = math.exp %160 : vector<1x128xf32>
    %162 = arith.addf %159, %161 : vector<1x128xf32>
    %163 = arith.subf %55, %151 : vector<1x128xf32>
    %164 = math.exp %163 : vector<1x128xf32>
    %165 = arith.addf %162, %164 : vector<1x128xf32>
    %166 = arith.subf %58, %151 : vector<1x128xf32>
    %167 = math.exp %166 : vector<1x128xf32>
    %168 = arith.addf %165, %167 : vector<1x128xf32>
    %169 = arith.subf %61, %151 : vector<1x128xf32>
    %170 = math.exp %169 : vector<1x128xf32>
    %171 = arith.addf %168, %170 : vector<1x128xf32>
    %172 = arith.subf %64, %151 : vector<1x128xf32>
    %173 = math.exp %172 : vector<1x128xf32>
    %174 = arith.addf %171, %173 : vector<1x128xf32>
    %cst_38 = arith.constant 1.000000e+00 : f32
    %175 = vector.broadcast %cst_38 : f32 to vector<1x128xf32>
    %176 = arith.divf %175, %174 : vector<1x128xf32>
    %177 = arith.maximumf %67, %70 : vector<1x128xf32>
    %178 = arith.maximumf %177, %73 : vector<1x128xf32>
    %179 = arith.maximumf %178, %76 : vector<1x128xf32>
    %180 = arith.maximumf %179, %79 : vector<1x128xf32>
    %181 = arith.maximumf %180, %82 : vector<1x128xf32>
    %182 = arith.maximumf %181, %85 : vector<1x128xf32>
    %183 = arith.maximumf %182, %88 : vector<1x128xf32>
    %184 = arith.subf %67, %183 : vector<1x128xf32>
    %185 = math.exp %184 : vector<1x128xf32>
    %186 = arith.subf %70, %183 : vector<1x128xf32>
    %187 = math.exp %186 : vector<1x128xf32>
    %188 = arith.addf %185, %187 : vector<1x128xf32>
    %189 = arith.subf %73, %183 : vector<1x128xf32>
    %190 = math.exp %189 : vector<1x128xf32>
    %191 = arith.addf %188, %190 : vector<1x128xf32>
    %192 = arith.subf %76, %183 : vector<1x128xf32>
    %193 = math.exp %192 : vector<1x128xf32>
    %194 = arith.addf %191, %193 : vector<1x128xf32>
    %195 = arith.subf %79, %183 : vector<1x128xf32>
    %196 = math.exp %195 : vector<1x128xf32>
    %197 = arith.addf %194, %196 : vector<1x128xf32>
    %198 = arith.subf %82, %183 : vector<1x128xf32>
    %199 = math.exp %198 : vector<1x128xf32>
    %200 = arith.addf %197, %199 : vector<1x128xf32>
    %201 = arith.subf %85, %183 : vector<1x128xf32>
    %202 = math.exp %201 : vector<1x128xf32>
    %203 = arith.addf %200, %202 : vector<1x128xf32>
    %204 = arith.subf %88, %183 : vector<1x128xf32>
    %205 = math.exp %204 : vector<1x128xf32>
    %206 = arith.addf %203, %205 : vector<1x128xf32>
    %cst_39 = arith.constant 1.000000e+00 : f32
    %207 = vector.broadcast %cst_39 : f32 to vector<1x128xf32>
    %208 = arith.divf %207, %206 : vector<1x128xf32>
    %209 = arith.maximumf %91, %94 : vector<1x128xf32>
    %210 = arith.maximumf %209, %97 : vector<1x128xf32>
    %211 = arith.maximumf %210, %100 : vector<1x128xf32>
    %212 = arith.maximumf %211, %103 : vector<1x128xf32>
    %213 = arith.maximumf %212, %106 : vector<1x128xf32>
    %214 = arith.maximumf %213, %109 : vector<1x128xf32>
    %215 = arith.maximumf %214, %112 : vector<1x128xf32>
    %216 = arith.subf %91, %215 : vector<1x128xf32>
    %217 = math.exp %216 : vector<1x128xf32>
    %218 = arith.subf %94, %215 : vector<1x128xf32>
    %219 = math.exp %218 : vector<1x128xf32>
    %220 = arith.addf %217, %219 : vector<1x128xf32>
    %221 = arith.subf %97, %215 : vector<1x128xf32>
    %222 = math.exp %221 : vector<1x128xf32>
    %223 = arith.addf %220, %222 : vector<1x128xf32>
    %224 = arith.subf %100, %215 : vector<1x128xf32>
    %225 = math.exp %224 : vector<1x128xf32>
    %226 = arith.addf %223, %225 : vector<1x128xf32>
    %227 = arith.subf %103, %215 : vector<1x128xf32>
    %228 = math.exp %227 : vector<1x128xf32>
    %229 = arith.addf %226, %228 : vector<1x128xf32>
    %230 = arith.subf %106, %215 : vector<1x128xf32>
    %231 = math.exp %230 : vector<1x128xf32>
    %232 = arith.addf %229, %231 : vector<1x128xf32>
    %233 = arith.subf %109, %215 : vector<1x128xf32>
    %234 = math.exp %233 : vector<1x128xf32>
    %235 = arith.addf %232, %234 : vector<1x128xf32>
    %236 = arith.subf %112, %215 : vector<1x128xf32>
    %237 = math.exp %236 : vector<1x128xf32>
    %238 = arith.addf %235, %237 : vector<1x128xf32>
    %cst_40 = arith.constant 1.000000e+00 : f32
    %239 = vector.broadcast %cst_40 : f32 to vector<1x128xf32>
    %240 = arith.divf %239, %238 : vector<1x128xf32>
    %241 = arith.mulf %121, %144 : vector<1x128xf32>
    %242 = arith.mulf %153, %176 : vector<1x128xf32>
    %243 = arith.addf %241, %242 : vector<1x128xf32>
    %244 = arith.mulf %185, %208 : vector<1x128xf32>
    %245 = arith.addf %243, %244 : vector<1x128xf32>
    %246 = arith.mulf %217, %240 : vector<1x128xf32>
    %247 = arith.addf %245, %246 : vector<1x128xf32>
    %cst_41 = arith.constant 2.500000e-01 : f32
    %248 = vector.broadcast %cst_41 : f32 to vector<1x128xf32>
    %249 = arith.mulf %247, %248 : vector<1x128xf32>
    %250 = arith.mulf %123, %144 : vector<1x128xf32>
    %251 = arith.mulf %155, %176 : vector<1x128xf32>
    %252 = arith.addf %250, %251 : vector<1x128xf32>
    %253 = arith.mulf %187, %208 : vector<1x128xf32>
    %254 = arith.addf %252, %253 : vector<1x128xf32>
    %255 = arith.mulf %219, %240 : vector<1x128xf32>
    %256 = arith.addf %254, %255 : vector<1x128xf32>
    %cst_42 = arith.constant 2.500000e-01 : f32
    %257 = vector.broadcast %cst_42 : f32 to vector<1x128xf32>
    %258 = arith.mulf %256, %257 : vector<1x128xf32>
    %259 = arith.mulf %126, %144 : vector<1x128xf32>
    %260 = arith.mulf %158, %176 : vector<1x128xf32>
    %261 = arith.addf %259, %260 : vector<1x128xf32>
    %262 = arith.mulf %190, %208 : vector<1x128xf32>
    %263 = arith.addf %261, %262 : vector<1x128xf32>
    %264 = arith.mulf %222, %240 : vector<1x128xf32>
    %265 = arith.addf %263, %264 : vector<1x128xf32>
    %cst_43 = arith.constant 2.500000e-01 : f32
    %266 = vector.broadcast %cst_43 : f32 to vector<1x128xf32>
    %267 = arith.mulf %265, %266 : vector<1x128xf32>
    %268 = arith.mulf %129, %144 : vector<1x128xf32>
    %269 = arith.mulf %161, %176 : vector<1x128xf32>
    %270 = arith.addf %268, %269 : vector<1x128xf32>
    %271 = arith.mulf %193, %208 : vector<1x128xf32>
    %272 = arith.addf %270, %271 : vector<1x128xf32>
    %273 = arith.mulf %225, %240 : vector<1x128xf32>
    %274 = arith.addf %272, %273 : vector<1x128xf32>
    %cst_44 = arith.constant 2.500000e-01 : f32
    %275 = vector.broadcast %cst_44 : f32 to vector<1x128xf32>
    %276 = arith.mulf %274, %275 : vector<1x128xf32>
    %277 = arith.mulf %132, %144 : vector<1x128xf32>
    %278 = arith.mulf %164, %176 : vector<1x128xf32>
    %279 = arith.addf %277, %278 : vector<1x128xf32>
    %280 = arith.mulf %196, %208 : vector<1x128xf32>
    %281 = arith.addf %279, %280 : vector<1x128xf32>
    %282 = arith.mulf %228, %240 : vector<1x128xf32>
    %283 = arith.addf %281, %282 : vector<1x128xf32>
    %cst_45 = arith.constant 2.500000e-01 : f32
    %284 = vector.broadcast %cst_45 : f32 to vector<1x128xf32>
    %285 = arith.mulf %283, %284 : vector<1x128xf32>
    %286 = arith.mulf %135, %144 : vector<1x128xf32>
    %287 = arith.mulf %167, %176 : vector<1x128xf32>
    %288 = arith.addf %286, %287 : vector<1x128xf32>
    %289 = arith.mulf %199, %208 : vector<1x128xf32>
    %290 = arith.addf %288, %289 : vector<1x128xf32>
    %291 = arith.mulf %231, %240 : vector<1x128xf32>
    %292 = arith.addf %290, %291 : vector<1x128xf32>
    %cst_46 = arith.constant 2.500000e-01 : f32
    %293 = vector.broadcast %cst_46 : f32 to vector<1x128xf32>
    %294 = arith.mulf %292, %293 : vector<1x128xf32>
    %295 = arith.mulf %138, %144 : vector<1x128xf32>
    %296 = arith.mulf %170, %176 : vector<1x128xf32>
    %297 = arith.addf %295, %296 : vector<1x128xf32>
    %298 = arith.mulf %202, %208 : vector<1x128xf32>
    %299 = arith.addf %297, %298 : vector<1x128xf32>
    %300 = arith.mulf %234, %240 : vector<1x128xf32>
    %301 = arith.addf %299, %300 : vector<1x128xf32>
    %cst_47 = arith.constant 2.500000e-01 : f32
    %302 = vector.broadcast %cst_47 : f32 to vector<1x128xf32>
    %303 = arith.mulf %301, %302 : vector<1x128xf32>
    %304 = arith.mulf %141, %144 : vector<1x128xf32>
    %305 = arith.mulf %173, %176 : vector<1x128xf32>
    %306 = arith.addf %304, %305 : vector<1x128xf32>
    %307 = arith.mulf %205, %208 : vector<1x128xf32>
    %308 = arith.addf %306, %307 : vector<1x128xf32>
    %309 = arith.mulf %237, %240 : vector<1x128xf32>
    %310 = arith.addf %308, %309 : vector<1x128xf32>
    %cst_48 = arith.constant 2.500000e-01 : f32
    %311 = vector.broadcast %cst_48 : f32 to vector<1x128xf32>
    %312 = arith.mulf %310, %311 : vector<1x128xf32>
    %313 = tpu.concatenate %249, %258, %267, %276, %285, %294, %303, %312 in 0 : vector<1x128xf32>, vector<1x128xf32>, vector<1x128xf32>, vector<1x128xf32>, vector<1x128xf32>, vector<1x128xf32>, vector<1x128xf32>, vector<1x128xf32> -> vector<8x128xf32>
    %c0_49 = arith.constant 0 : index
    %c0_50 = arith.constant 0 : index
    %314 = vector.load %arg7[%c0_49, %c0_50] : memref<8x128xf32, #tpu.memory_space<vmem>>, vector<8x128xf32>
    tpu.vector_store %arg7[%c0_49, %c0_50], %313 {strides = array<i32>} : memref<8x128xf32, #tpu.memory_space<vmem>>, vector<8x128xf32>,
    %315 = vector.broadcast %121 : vector<1x128xf32> to vector<32x128xf32>
    %316 = arith.mulf %315, %9 : vector<32x128xf32>
    %317 = vector.broadcast %123 : vector<1x128xf32> to vector<32x128xf32>
    %318 = arith.mulf %317, %10 : vector<32x128xf32>
    %319 = arith.addf %316, %318 : vector<32x128xf32>
    %320 = vector.broadcast %126 : vector<1x128xf32> to vector<32x128xf32>
    %321 = arith.mulf %320, %11 : vector<32x128xf32>
    %322 = arith.addf %319, %321 : vector<32x128xf32>
    %323 = vector.broadcast %129 : vector<1x128xf32> to vector<32x128xf32>
    %324 = arith.mulf %323, %12 : vector<32x128xf32>
    %325 = arith.addf %322, %324 : vector<32x128xf32>
    %326 = vector.broadcast %132 : vector<1x128xf32> to vector<32x128xf32>
    %327 = arith.mulf %326, %13 : vector<32x128xf32>
    %328 = arith.addf %325, %327 : vector<32x128xf32>
    %329 = vector.broadcast %135 : vector<1x128xf32> to vector<32x128xf32>
    %330 = arith.mulf %329, %14 : vector<32x128xf32>
    %331 = arith.addf %328, %330 : vector<32x128xf32>
    %332 = vector.broadcast %138 : vector<1x128xf32> to vector<32x128xf32>
    %333 = arith.mulf %332, %15 : vector<32x128xf32>
    %334 = arith.addf %331, %333 : vector<32x128xf32>
    %335 = vector.broadcast %141 : vector<1x128xf32> to vector<32x128xf32>
    %336 = arith.mulf %335, %16 : vector<32x128xf32>
    %337 = arith.addf %334, %336 : vector<32x128xf32>
    %338 = vector.broadcast %144 : vector<1x128xf32> to vector<32x128xf32>
    %339 = arith.mulf %337, %338 : vector<32x128xf32>
    %340 = vector.broadcast %153 : vector<1x128xf32> to vector<32x128xf32>
    %341 = arith.mulf %340, %9 : vector<32x128xf32>
    %342 = vector.broadcast %155 : vector<1x128xf32> to vector<32x128xf32>
    %343 = arith.mulf %342, %10 : vector<32x128xf32>
    %344 = arith.addf %341, %343 : vector<32x128xf32>
    %345 = vector.broadcast %158 : vector<1x128xf32> to vector<32x128xf32>
    %346 = arith.mulf %345, %11 : vector<32x128xf32>
    %347 = arith.addf %344, %346 : vector<32x128xf32>
    %348 = vector.broadcast %161 : vector<1x128xf32> to vector<32x128xf32>
    %349 = arith.mulf %348, %12 : vector<32x128xf32>
    %350 = arith.addf %347, %349 : vector<32x128xf32>
    %351 = vector.broadcast %164 : vector<1x128xf32> to vector<32x128xf32>
    %352 = arith.mulf %351, %13 : vector<32x128xf32>
    %353 = arith.addf %350, %352 : vector<32x128xf32>
    %354 = vector.broadcast %167 : vector<1x128xf32> to vector<32x128xf32>
    %355 = arith.mulf %354, %14 : vector<32x128xf32>
    %356 = arith.addf %353, %355 : vector<32x128xf32>
    %357 = vector.broadcast %170 : vector<1x128xf32> to vector<32x128xf32>
    %358 = arith.mulf %357, %15 : vector<32x128xf32>
    %359 = arith.addf %356, %358 : vector<32x128xf32>
    %360 = vector.broadcast %173 : vector<1x128xf32> to vector<32x128xf32>
    %361 = arith.mulf %360, %16 : vector<32x128xf32>
    %362 = arith.addf %359, %361 : vector<32x128xf32>
    %363 = vector.broadcast %176 : vector<1x128xf32> to vector<32x128xf32>
    %364 = arith.mulf %362, %363 : vector<32x128xf32>
    %365 = vector.broadcast %185 : vector<1x128xf32> to vector<32x128xf32>
    %366 = arith.mulf %365, %9 : vector<32x128xf32>
    %367 = vector.broadcast %187 : vector<1x128xf32> to vector<32x128xf32>
    %368 = arith.mulf %367, %10 : vector<32x128xf32>
    %369 = arith.addf %366, %368 : vector<32x128xf32>
    %370 = vector.broadcast %190 : vector<1x128xf32> to vector<32x128xf32>
    %371 = arith.mulf %370, %11 : vector<32x128xf32>
    %372 = arith.addf %369, %371 : vector<32x128xf32>
    %373 = vector.broadcast %193 : vector<1x128xf32> to vector<32x128xf32>
    %374 = arith.mulf %373, %12 : vector<32x128xf32>
    %375 = arith.addf %372, %374 : vector<32x128xf32>
    %376 = vector.broadcast %196 : vector<1x128xf32> to vector<32x128xf32>
    %377 = arith.mulf %376, %13 : vector<32x128xf32>
    %378 = arith.addf %375, %377 : vector<32x128xf32>
    %379 = vector.broadcast %199 : vector<1x128xf32> to vector<32x128xf32>
    %380 = arith.mulf %379, %14 : vector<32x128xf32>
    %381 = arith.addf %378, %380 : vector<32x128xf32>
    %382 = vector.broadcast %202 : vector<1x128xf32> to vector<32x128xf32>
    %383 = arith.mulf %382, %15 : vector<32x128xf32>
    %384 = arith.addf %381, %383 : vector<32x128xf32>
    %385 = vector.broadcast %205 : vector<1x128xf32> to vector<32x128xf32>
    %386 = arith.mulf %385, %16 : vector<32x128xf32>
    %387 = arith.addf %384, %386 : vector<32x128xf32>
    %388 = vector.broadcast %208 : vector<1x128xf32> to vector<32x128xf32>
    %389 = arith.mulf %387, %388 : vector<32x128xf32>
    %390 = vector.broadcast %217 : vector<1x128xf32> to vector<32x128xf32>
    %391 = arith.mulf %390, %9 : vector<32x128xf32>
    %392 = vector.broadcast %219 : vector<1x128xf32> to vector<32x128xf32>
    %393 = arith.mulf %392, %10 : vector<32x128xf32>
    %394 = arith.addf %391, %393 : vector<32x128xf32>
    %395 = vector.broadcast %222 : vector<1x128xf32> to vector<32x128xf32>
    %396 = arith.mulf %395, %11 : vector<32x128xf32>
    %397 = arith.addf %394, %396 : vector<32x128xf32>
    %398 = vector.broadcast %225 : vector<1x128xf32> to vector<32x128xf32>
    %399 = arith.mulf %398, %12 : vector<32x128xf32>
    %400 = arith.addf %397, %399 : vector<32x128xf32>
    %401 = vector.broadcast %228 : vector<1x128xf32> to vector<32x128xf32>
    %402 = arith.mulf %401, %13 : vector<32x128xf32>
    %403 = arith.addf %400, %402 : vector<32x128xf32>
    %404 = vector.broadcast %231 : vector<1x128xf32> to vector<32x128xf32>
    %405 = arith.mulf %404, %14 : vector<32x128xf32>
    %406 = arith.addf %403, %405 : vector<32x128xf32>
    %407 = vector.broadcast %234 : vector<1x128xf32> to vector<32x128xf32>
    %408 = arith.mulf %407, %15 : vector<32x128xf32>
    %409 = arith.addf %406, %408 : vector<32x128xf32>
    %410 = vector.broadcast %237 : vector<1x128xf32> to vector<32x128xf32>
    %411 = arith.mulf %410, %16 : vector<32x128xf32>
    %412 = arith.addf %409, %411 : vector<32x128xf32>
    %413 = vector.broadcast %240 : vector<1x128xf32> to vector<32x128xf32>
    %414 = arith.mulf %412, %413 : vector<32x128xf32>
    %415 = tpu.concatenate %339, %364, %389, %414 in 0 : vector<32x128xf32>, vector<32x128xf32>, vector<32x128xf32>, vector<32x128xf32> -> vector<128x128xf32>
    %c0_51 = arith.constant 0 : index
    %c0_52 = arith.constant 0 : index
    %416 = vector.load %arg4[%c0_51, %c0_52] : memref<32x128xbf16, #tpu.memory_space<vmem>>, vector<32x128xbf16>
    %417 = arith.truncf %415 : vector<128x128xf32> to vector<128x128xbf16>
    %cst_53 = arith.constant dense<0.000000e+00> : vector<32x128xf32>
    %418 = tpu.matmul %416, %417, %cst_53 {dimension_numbers = #tpu.dot_dimension_numbers<[1], [0], [0], [1], [0, 0, 1, 1], [], []>} : vector<32x128xbf16>, vector<128x128xbf16>, vector<32x128xf32> -> vector<32x128xf32>
    %c0_54 = arith.constant 0 : index
    %c0_55 = arith.constant 0 : index
    %419 = vector.load %arg5[%c0_54, %c0_55] : memref<32x32xbf16, #tpu.memory_space<vmem>>, vector<32x32xbf16>
    %cst_56 = arith.constant dense<0.000000e+00> : vector<32x128xf32>
    %420 = tpu.matmul %419, %0, %cst_56 {dimension_numbers = #tpu.dot_dimension_numbers<[1], [0], [0], [1], [0, 0, 1, 1], [], []>} : vector<32x32xbf16>, vector<32x128xbf16>, vector<32x128xf32> -> vector<32x128xf32>
    %421 = arith.addf %418, %420 : vector<32x128xf32>
    %422 = math.tanh %421 : vector<32x128xf32>
    %c0_57 = arith.constant 0 : index
    %c0_58 = arith.constant 0 : index
    %423 = vector.load %arg6[%c0_57, %c0_58] : memref<32x128xf32, #tpu.memory_space<vmem>>, vector<32x128xf32>
    tpu.vector_store %arg6[%c0_57, %c0_58], %422 {strides = array<i32>} : memref<32x128xf32, #tpu.memory_space<vmem>>, vector<32x128xf32>,
    return
  }
  func.func @transform_0(%arg0: i32) -> (i32, i32) {
    %c0_i32 = arith.constant 0 : i32
    %c0_i32_0 = arith.constant 0 : i32
    return %c0_i32, %arg0 : i32, i32
  }
  func.func @transform_1(%arg0: i32) -> (i32, i32) {
    %c0_i32 = arith.constant 0 : i32
    %c0_i32_0 = arith.constant 0 : i32
    return %c0_i32, %arg0 : i32, i32
  }
  func.func @transform_2(%arg0: i32) -> (i32, i32) {
    %c0_i32 = arith.constant 0 : i32
    %c0_i32_0 = arith.constant 0 : i32
    %c0_i32_1 = arith.constant 0 : i32
    return %c0_i32, %c0_i32_0 : i32, i32
  }
  func.func @transform_3(%arg0: i32) -> (i32, i32) {
    %c0_i32 = arith.constant 0 : i32
    %c0_i32_0 = arith.constant 0 : i32
    %c0_i32_1 = arith.constant 0 : i32
    return %c0_i32, %c0_i32_0 : i32, i32
  }
  func.func @transform_4(%arg0: i32) -> (i32, i32) {
    %c0_i32 = arith.constant 0 : i32
    %c0_i32_0 = arith.constant 0 : i32
    %c0_i32_1 = arith.constant 0 : i32
    return %c0_i32, %c0_i32_0 : i32, i32
  }
  func.func @transform_5(%arg0: i32) -> (i32, i32) {
    %c0_i32 = arith.constant 0 : i32
    %c0_i32_0 = arith.constant 0 : i32
    return %c0_i32, %arg0 : i32, i32
  }
  func.func @transform_6(%arg0: i32) -> (i32, i32) {
    %c0_i32 = arith.constant 0 : i32
    %c0_i32_0 = arith.constant 0 : i32
    return %c0_i32, %arg0 : i32, i32
  }
}

</mosaic_0001>

<llo_original>
// kernel: tpu_custom_call.1
$region0: #{tpu_custom_call.1}
  #allocation0 [shape = 'u32[]', space=smem, size = 0x4, offset = 0x4, fixed_abs, tag = 'smem constant byte address 0x4 - core index']
  #allocation1 [shape = 'u32[144,128]{1,0:T(1,128)}', space=vmem, size = 0x12000, scoped, tag = 'internal scratch']
  %s0 = inlined_call_operand.vmem [shape: bf16[32,128], index: 0, kind: input, shape index: {}]
  %s1 = inlined_call_operand.hbm [shape: bf16[256,128], index: 1, kind: input, shape index: {}]
  %s2 = inlined_call_operand.vmem [shape: bf16[128,32], index: 2, kind: input, shape index: {}]
  %s3 = inlined_call_operand.vmem [shape: bf16[32,128], index: 3, kind: input, shape index: {}]
  %s4 = inlined_call_operand.vmem [shape: bf16[32,32], index: 4, kind: input, shape index: {}]
  %s5 = inlined_call_operand.hbm [shape: f32[32,128], index: 5, kind: output, shape index: {0}]
  %s6 = inlined_call_operand.hbm [shape: f32[8,128], index: 6, kind: output, shape index: {1}]
  %7 = xla_tuple %s5, %s6
  %s8 = sld [smem:[#allocation0]]
  $region42: #{tpu_custom_call.1} parent=0
    _
  %s10 = ssub.s32 1, %s8
  %s11 = scalar_select 0, %s10, %s8
  $region1: #{tpu_custom_call.1} parent=0
    #allocation2 [shape = 'u8[65536]{0}', space=vmem, size = 0x10000, scoped, tag = 'input window, operand 1, single buffered']
    #allocation3 [shape = 's32[1]{0}', space=sflag, size = 0x4, scoped, tag = 'scoped memory for tpu_custom_call.1']
    #allocation4 [shape = 's32[1]{0}', space=sflag, size = 0x4, scoped, tag = 'scoped memory for tpu_custom_call.1']
    #allocation5 [shape = 'u8[16384]{0}', space=vmem, size = 0x4000, scoped, tag = 'output window, operand 0, single buffered']
    #allocation6 [shape = 'u8[4096]{0}', space=vmem, size = 0x1000, scoped, tag = 'output window, operand 1, single buffered']
    #allocation7 [shape = 's32[1]{0}', space=sflag, size = 0x4, scoped, tag = 'scoped memory for tpu_custom_call.1']
    %12 = vsyncpa [#allocation3], 0
    %13 = vsyncpa [#allocation4], 0
    %14 = vsyncpa [#allocation7], 0
    // Predicated region
    $region2: #{tpu_custom_call.1} parent=1 // pred_check
      _
    $region3: #{tpu_custom_call.1} parent=1 // pred_check_branch
      %16 = sbr.rel (0) target = $region5
    $region4: #{tpu_custom_call.1} parent=1 // pred_region
      _
    $region5: #{tpu_custom_call.1} parent=1 // pred_fallthru
      _
    // Predicated region
    $region6: #{tpu_custom_call.1} parent=1 // pred_check
      _
    $region7: #{tpu_custom_call.1} parent=1 // pred_check_branch
      %18 = sbr.rel (0) target = $region9
    $region8: #{tpu_custom_call.1} parent=1 // pred_region
      %s20 = ssub.s32 2048, 2048
      %21 = vsyncadd [#allocation3], %s20
      %s22 = sshll.u32 [#allocation2], 4
      %s23 = int_to_ptr.vmem [resolvable:$true] %s22
      %28 = dma.hbm_to_vmem [thread:$0]  %s1, 2048, %s23, [#allocation3], 64, 64, 4
    $region9: #{tpu_custom_call.1} parent=1 // pred_fallthru
      _
    // Predicated region
    $region10: #{tpu_custom_call.1} parent=1 // pred_check
      _
    $region11: #{tpu_custom_call.1} parent=1 // pred_check_branch
      %30 = sbr.rel (0) target = $region13
    $region12: #{tpu_custom_call.1} parent=1 // pred_region
      _
    $region13: #{tpu_custom_call.1} parent=1 // pred_fallthru
      _
    // Predicated region
    $region14: #{tpu_custom_call.1} parent=1 // pred_check
      _
    $region15: #{tpu_custom_call.1} parent=1 // pred_check_branch
      %32 = sbr.rel (0) target = $region17
    $region16: #{tpu_custom_call.1} parent=1 // pred_region
      _
    $region17: #{tpu_custom_call.1} parent=1 // pred_fallthru
      _
    // Predicated region
    $region18: #{tpu_custom_call.1} parent=1 // pred_check
      _
    $region19: #{tpu_custom_call.1} parent=1 // pred_check_branch
      %34 = sbr.rel (0) target = $region21
    $region20: #{tpu_custom_call.1} parent=1 // pred_region
      _
    $region21: #{tpu_custom_call.1} parent=1 // pred_fallthru
      _
    // Predicated region
    $region22: #{tpu_custom_call.1} parent=1 // pred_check
      _
    $region23: #{tpu_custom_call.1} parent=1 // pred_check_branch
      %36 = sbr.rel (0) target = $region25
    $region24: #{tpu_custom_call.1} parent=1 // pred_region
      %37 = dma.done [#allocation3], 2048
    $region25: #{tpu_custom_call.1} parent=1 // pred_fallthru
      _
    %v39 = vld [vmem:[%s0] sm:$0xf]
    %v40 = vld [vmem:[%s0 + $0x4] sm:$0xf]
    %v41 = vld [vmem:[%s0 + $0x8] sm:$0xf]
    %v42 = vld [vmem:[%s0 + $0xc] sm:$0xf]
    %v43 = vld [vmem:[#allocation2] sm:$0xf]
    %v44 = vld [vmem:[#allocation2 + $0x4] sm:$0xf]
    %v45 = vld [vmem:[#allocation2 + $0x8] sm:$0xf]
    %v46 = vld [vmem:[#allocation2 + $0xc] sm:$0xf]
    %v47 = vld [vmem:[#allocation2 + $0x10] sm:$0xf]
    %v48 = vld [vmem:[#allocation2 + $0x14] sm:$0xf]
    %v49 = vld [vmem:[#allocation2 + $0x18] sm:$0xf]
    %v50 = vld [vmem:[#allocation2 + $0x1c] sm:$0xf]
    %v51 = vld [vmem:[#allocation2 + $0x20] sm:$0xf]
    %v52 = vld [vmem:[#allocation2 + $0x24] sm:$0xf]
    %v53 = vld [vmem:[#allocation2 + $0x28] sm:$0xf]
    %v54 = vld [vmem:[#allocation2 + $0x2c] sm:$0xf]
    %v55 = vld [vmem:[#allocation2 + $0x30] sm:$0xf]
    %v56 = vld [vmem:[#allocation2 + $0x34] sm:$0xf]
    %v57 = vld [vmem:[#allocation2 + $0x38] sm:$0xf]
    %v58 = vld [vmem:[#allocation2 + $0x3c] sm:$0xf]
    %v59 = vld [vmem:[#allocation2 + $0x40] sm:$0xf]
    %v60 = vld [vmem:[#allocation2 + $0x44] sm:$0xf]
    %v61 = vld [vmem:[#allocation2 + $0x48] sm:$0xf]
    %v62 = vld [vmem:[#allocation2 + $0x4c] sm:$0xf]
    %v63 = vld [vmem:[#allocation2 + $0x50] sm:$0xf]
    %v64 = vld [vmem:[#allocation2 + $0x54] sm:$0xf]
    %v65 = vld [vmem:[#allocation2 + $0x58] sm:$0xf]
    %v66 = vld [vmem:[#allocation2 + $0x5c] sm:$0xf]
    %v67 = vld [vmem:[#allocation2 + $0x60] sm:$0xf]
    %v68 = vld [vmem:[#allocation2 + $0x64] sm:$0xf]
    %v69 = vld [vmem:[#allocation2 + $0x68] sm:$0xf]
    %v70 = vld [vmem:[#allocation2 + $0x6c] sm:$0xf]
    %v71 = vld [vmem:[#allocation2 + $0x70] sm:$0xf]
    %v72 = vld [vmem:[#allocation2 + $0x74] sm:$0xf]
    %v73 = vld [vmem:[#allocation2 + $0x78] sm:$0xf]
    %v74 = vld [vmem:[#allocation2 + $0x7c] sm:$0xf]
    %v75 = vunpack.c.l.bf16 %v43
    %v76 = vunpack.c.l.bf16 %v44
    %v77 = vunpack.c.l.bf16 %v45
    %v78 = vunpack.c.l.bf16 %v46
    %v79 = vunpack.c.l.bf16 %v47
    %v80 = vunpack.c.l.bf16 %v48
    %v81 = vunpack.c.l.bf16 %v49
    %v82 = vunpack.c.l.bf16 %v50
    %v83 = vunpack.c.l.bf16 %v51
    %v84 = vunpack.c.l.bf16 %v52
    %v85 = vunpack.c.l.bf16 %v53
    %v86 = vunpack.c.l.bf16 %v54
    %v87 = vunpack.c.l.bf16 %v55
    %v88 = vunpack.c.l.bf16 %v56
    %v89 = vunpack.c.l.bf16 %v57
    %v90 = vunpack.c.l.bf16 %v58
    %v91 = vunpack.c.l.bf16 %v59
    %v92 = vunpack.c.l.bf16 %v60
    %v93 = vunpack.c.l.bf16 %v61
    %v94 = vunpack.c.l.bf16 %v62
    %v95 = vunpack.c.l.bf16 %v63
    %v96 = vunpack.c.l.bf16 %v64
    %v97 = vunpack.c.l.bf16 %v65
    %v98 = vunpack.c.l.bf16 %v66
    %v99 = vunpack.c.l.bf16 %v67
    %v100 = vunpack.c.l.bf16 %v68
    %v101 = vunpack.c.l.bf16 %v69
    %v102 = vunpack.c.l.bf16 %v70
    %v103 = vunpack.c.l.bf16 %v71
    %v104 = vunpack.c.l.bf16 %v72
    %v105 = vunpack.c.l.bf16 %v73
    %v106 = vunpack.c.l.bf16 %v74
    %v107 = vld [vmem:[%s2] sm:$0xf]
    %v108 = vld [vmem:[%s2 + $0x4] sm:$0xf]
    %v109 = vld [vmem:[%s2 + $0x8] sm:$0xf]
    %v110 = vld [vmem:[%s2 + $0xc] sm:$0xf]
    %v111 = vld [vmem:[%s2 + $0x10] sm:$0xf]
    %v112 = vld [vmem:[%s2 + $0x14] sm:$0xf]
    %v113 = vld [vmem:[%s2 + $0x18] sm:$0xf]
    %v114 = vld [vmem:[%s2 + $0x1c] sm:$0xf]
    %v115 = vld [vmem:[%s2 + $0x20] sm:$0xf]
    %v116 = vld [vmem:[%s2 + $0x24] sm:$0xf]
    %v117 = vld [vmem:[%s2 + $0x28] sm:$0xf]
    %v118 = vld [vmem:[%s2 + $0x2c] sm:$0xf]
    %v119 = vld [vmem:[%s2 + $0x30] sm:$0xf]
    %v120 = vld [vmem:[%s2 + $0x34] sm:$0xf]
    %v121 = vld [vmem:[%s2 + $0x38] sm:$0xf]
    %v122 = vld [vmem:[%s2 + $0x3c] sm:$0xf]
    %v139 = vunpack.c.l.b16 %v107
    %v140 = vunpack.c.l.b16 %v108
    %v141 = vunpack.c.l.b16 %v109
    %v142 = vunpack.c.l.b16 %v110
    %v143 = vunpack.c.l.b16 %v111
    %v144 = vunpack.c.l.b16 %v112
    %v145 = vunpack.c.l.b16 %v113
    %v146 = vunpack.c.l.b16 %v114
    %v147 = vunpack.c.l.b16 %v115
    %v148 = vunpack.c.l.b16 %v116
    %v149 = vunpack.c.l.b16 %v117
    %v150 = vunpack.c.l.b16 %v118
    %v151 = vunpack.c.l.b16 %v119
    %v152 = vunpack.c.l.b16 %v120
    %v153 = vunpack.c.l.b16 %v121
    %v154 = vunpack.c.l.b16 %v122
    %v155 = vpack.c.b16 %v140, %v139
    %v156 = vpack.c.b16 %v142, %v141
    %v157 = vpack.c.b16 %v144, %v143
    %v158 = vpack.c.b16 %v146, %v145
    %v159 = vpack.c.b16 %v148, %v147
    %v160 = vpack.c.b16 %v150, %v149
    %v161 = vpack.c.b16 %v152, %v151
    %v162 = vpack.c.b16 %v154, %v153
    %v167 = vunpack.c.l.b16 %v39
    %v168 = vunpack.c.l.b16 %v40
    %v169 = vunpack.c.l.b16 %v41
    %v170 = vunpack.c.l.b16 %v42
    %v171 = vpack.c.b16 %v168, %v167
    %v172 = vpack.c.b16 %v170, %v169
    %vm175 = vcmask 261120
    %v177 = vsel %vm175, %v155, 0
    %v180 = vsel %vm175, %v156, 0
    %v183 = vsel %vm175, %v157, 0
    %v186 = vsel %vm175, %v158, 0
    %v189 = vsel %vm175, %v159, 0
    %v192 = vsel %vm175, %v160, 0
    %v195 = vsel %vm175, %v161, 0
    %v198 = vsel %vm175, %v162, 0
    %200 = vmatprep.subr.bf16.mxu0 0
    %201 = vmatpush1.bf16.msra.mxu0 %v171
    %202 = vmatprep.subr.bf16.mxu0 0
    %203 = vmatpush1.bf16.msra.mxu0 %v172
    %204 = vmatprep.subr.bf16.mxu0 0
    %205 = vmatpush1.bf16.msra.mxu0 0
    %206 = vmatprep.subr.bf16.mxu0 0
    %207 = vmatpush1.bf16.msra.mxu0 0
    %208 = vmatprep.subr.bf16.mxu0 0
    %209 = vmatpush1.bf16.msra.mxu0 0
    %210 = vmatprep.subr.bf16.mxu0 0
    %211 = vmatpush1.bf16.msra.mxu0 0
    %212 = vmatprep.subr.bf16.mxu0 0
    %213 = vmatpush1.bf16.msra.mxu0 0
    %214 = vmatprep.subr.bf16.mxu0 0
    %215 = vmatpush1.bf16.msra.mxu0 0
    %216 = vmatprep.subr.bf16.mxu0 0
    %217 = vmatpush1.bf16.msra.mxu0 0
    %218 = vmatprep.subr.bf16.mxu0 0
    %219 = vmatpush1.bf16.msra.mxu0 0
    %220 = vmatprep.subr.bf16.mxu0 0
    %221 = vmatpush1.bf16.msra.mxu0 0
    %222 = vmatprep.subr.bf16.mxu0 0
    %223 = vmatpush1.bf16.msra.mxu0 0
    %224 = vmatprep.subr.bf16.mxu0 0
    %225 = vmatpush1.bf16.msra.mxu0 0
    %226 = vmatprep.subr.bf16.mxu0 0
    %227 = vmatpush1.bf16.msra.mxu0 0
    %228 = vmatprep.subr.bf16.mxu0 0
    %229 = vmatpush1.bf16.msra.mxu0 0
    %230 = vmatprep.subr.bf16.mxu0 0
    %231 = vmatpush1.bf16.msra.mxu0 0
    %232 = vmatprep.mubr.bf16.mxu0 0
    %233 = vmatmul.mubr.bf16.gmra.mrb[0].mxu0 %v177
    %v234 = vpop.f32.mrb[0].mxu0
    %v235 = vadd.f32 0.0, %v234
    %v236 = vpop.f32.mrb[0].mxu0
    %v237 = vpop.f32.mrb[0].mxu0
    %v238 = vadd.f32 0.0, %v237
    %v239 = vpop.f32.mrb[0].mxu0
    %240 = vmatprep.mubr.bf16.mxu0 0
    %241 = vmatmul.mubr.bf16.gmra.mrb[0].mxu0 %v180
    %v242 = vpop.f32.mrb[0].mxu0
    %v243 = vadd.f32 0.0, %v242
    %v244 = vpop.f32.mrb[0].mxu0
    %v245 = vpop.f32.mrb[0].mxu0
    %v246 = vadd.f32 0.0, %v245
    %v247 = vpop.f32.mrb[0].mxu0
    %248 = vmatprep.mubr.bf16.mxu0 0
    %249 = vmatmul.mubr.bf16.gmra.mrb[0].mxu0 %v183
    %v250 = vpop.f32.mrb[0].mxu0
    %v251 = vadd.f32 0.0, %v250
    %v252 = vpop.f32.mrb[0].mxu0
    %v253 = vpop.f32.mrb[0].mxu0
    %v254 = vadd.f32 0.0, %v253
    %v255 = vpop.f32.mrb[0].mxu0
    %256 = vmatprep.mubr.bf16.mxu0 0
    %257 = vmatmul.mubr.bf16.gmra.mrb[0].mxu0 %v186
    %v258 = vpop.f32.mrb[0].mxu0
    %v259 = vadd.f32 0.0, %v258
    %v260 = vpop.f32.mrb[0].mxu0
    %v261 = vpop.f32.mrb[0].mxu0
    %v262 = vadd.f32 0.0, %v261
    %v263 = vpop.f32.mrb[0].mxu0
    %264 = vmatprep.mubr.bf16.mxu0 0
    %265 = vmatmul.mubr.bf16.gmra.mrb[0].mxu0 %v189
    %v266 = vpop.f32.mrb[0].mxu0
    %v267 = vadd.f32 0.0, %v266
    %v268 = vpop.f32.mrb[0].mxu0
    %v269 = vpop.f32.mrb[0].mxu0
    %v270 = vadd.f32 0.0, %v269
    %v271 = vpop.f32.mrb[0].mxu0
    %272 = vmatprep.mubr.bf16.mxu0 0
    %273 = vmatmul.mubr.bf16.gmra.mrb[0].mxu0 %v192
    %v274 = vpop.f32.mrb[0].mxu0
    %v275 = vadd.f32 0.0, %v274
    %v276 = vpop.f32.mrb[0].mxu0
    %v277 = vpop.f32.mrb[0].mxu0
    %v278 = vadd.f32 0.0, %v277
    %v279 = vpop.f32.mrb[0].mxu0
    %280 = vmatprep.mubr.bf16.mxu0 0
    %281 = vmatmul.mubr.bf16.gmra.mrb[0].mxu0 %v195
    %v282 = vpop.f32.mrb[0].mxu0
    %v283 = vadd.f32 0.0, %v282
    %v284 = vpop.f32.mrb[0].mxu0
    %v285 = vpop.f32.mrb[0].mxu0
    %v286 = vadd.f32 0.0, %v285
    %v287 = vpop.f32.mrb[0].mxu0
    %288 = vmatprep.mubr.bf16.mxu0 0
    %289 = vmatmul.mubr.bf16.gmra.mrb[0].mxu0 %v198
    %v290 = vpop.f32.mrb[0].mxu0
    %v291 = vadd.f32 0.0, %v290
    %v292 = vpop.f32.mrb[0].mxu0
    %v293 = vpop.f32.mrb[0].mxu0
    %v294 = vadd.f32 0.0, %v293
    %v295 = vpop.f32.mrb[0].mxu0
    %296 = vdwg.mxu0
    %v297 = vmul.f32 %v235, %v75
    %v298 = vmul.f32 %v238, %v76
    %v299 = vmul.f32 %v243, %v77
    %v300 = vmul.f32 %v246, %v78
    %v301 = vadd.f32 %v297, %v298
    %v302 = vadd.f32 %v301, %v299
    %v303 = vadd.f32 %v302, %v300
    %v304 = vrot.slane %v303, 4
    %v305 = vadd.f32 %v303, %v304
    %v306 = vrot.slane %v305, 2
    %v307 = vadd.f32 %v305, %v306
    %v308 = vrot.slane %v307, 1
    %v309 = vadd.f32 %v307, %v308
    %v310 = vmul.f32 %v235, %v79
    %v311 = vmul.f32 %v238, %v80
    %v312 = vmul.f32 %v243, %v81
    %v313 = vmul.f32 %v246, %v82
    %v314 = vadd.f32 %v310, %v311
    %v315 = vadd.f32 %v314, %v312
    %v316 = vadd.f32 %v315, %v313
    %v317 = vrot.slane %v316, 4
    %v318 = vadd.f32 %v316, %v317
    %v319 = vrot.slane %v318, 2
    %v320 = vadd.f32 %v318, %v319
    %v321 = vrot.slane %v320, 1
    %v322 = vadd.f32 %v320, %v321
    %v323 = vmul.f32 %v235, %v83
    %v324 = vmul.f32 %v238, %v84
    %v325 = vmul.f32 %v243, %v85
    %v326 = vmul.f32 %v246, %v86
    %v327 = vadd.f32 %v323, %v324
    %v328 = vadd.f32 %v327, %v325
    %v329 = vadd.f32 %v328, %v326
    %v330 = vrot.slane %v329, 4
    %v331 = vadd.f32 %v329, %v330
    %v332 = vrot.slane %v331, 2
    %v333 = vadd.f32 %v331, %v332
    %v334 = vrot.slane %v333, 1
    %v335 = vadd.f32 %v333, %v334
    %v336 = vmul.f32 %v235, %v87
    %v337 = vmul.f32 %v238, %v88
    %v338 = vmul.f32 %v243, %v89
    %v339 = vmul.f32 %v246, %v90
    %v340 = vadd.f32 %v336, %v337
    %v341 = vadd.f32 %v340, %v338
    %v342 = vadd.f32 %v341, %v339
    %v343 = vrot.slane %v342, 4
    %v344 = vadd.f32 %v342, %v343
    %v345 = vrot.slane %v344, 2
    %v346 = vadd.f32 %v344, %v345
    %v347 = vrot.slane %v346, 1
    %v348 = vadd.f32 %v346, %v347
    %v349 = vmul.f32 %v235, %v91
    %v350 = vmul.f32 %v238, %v92
    %v351 = vmul.f32 %v243, %v93
    %v352 = vmul.f32 %v246, %v94
    %v353 = vadd.f32 %v349, %v350
    %v354 = vadd.f32 %v353, %v351
    %v355 = vadd.f32 %v354, %v352
    %v356 = vrot.slane %v355, 4
    %v357 = vadd.f32 %v355, %v356
    %v358 = vrot.slane %v357, 2
    %v359 = vadd.f32 %v357, %v358
    %v360 = vrot.slane %v359, 1
    %v361 = vadd.f32 %v359, %v360
    %v362 = vmul.f32 %v235, %v95
    %v363 = vmul.f32 %v238, %v96
    %v364 = vmul.f32 %v243, %v97
    %v365 = vmul.f32 %v246, %v98
    %v366 = vadd.f32 %v362, %v363
    %v367 = vadd.f32 %v366, %v364
    %v368 = vadd.f32 %v367, %v365
    %v369 = vrot.slane %v368, 4
    %v370 = vadd.f32 %v368, %v369
    %v371 = vrot.slane %v370, 2
    %v372 = vadd.f32 %v370, %v371
    %v373 = vrot.slane %v372, 1
    %v374 = vadd.f32 %v372, %v373
    %v375 = vmul.f32 %v235, %v99
    %v376 = vmul.f32 %v238, %v100
    %v377 = vmul.f32 %v243, %v101
    %v378 = vmul.f32 %v246, %v102
    %v379 = vadd.f32 %v375, %v376
    %v380 = vadd.f32 %v379, %v377
    %v381 = vadd.f32 %v380, %v378
    %v382 = vrot.slane %v381, 4
    %v383 = vadd.f32 %v381, %v382
    %v384 = vrot.slane %v383, 2
    %v385 = vadd.f32 %v383, %v384
    %v386 = vrot.slane %v385, 1
    %v387 = vadd.f32 %v385, %v386
    %v388 = vmul.f32 %v235, %v103
    %v389 = vmul.f32 %v238, %v104
    %v390 = vmul.f32 %v243, %v105
    %v391 = vmul.f32 %v246, %v106
    %v392 = vadd.f32 %v388, %v389
    %v393 = vadd.f32 %v392, %v390
    %v394 = vadd.f32 %v393, %v391
    %v395 = vrot.slane %v394, 4
    %v396 = vadd.f32 %v394, %v395
    %v397 = vrot.slane %v396, 2
    %v398 = vadd.f32 %v396, %v397
    %v399 = vrot.slane %v398, 1
    %v400 = vadd.f32 %v398, %v399
    %v401 = vmul.f32 %v251, %v75
    %v402 = vmul.f32 %v254, %v76
    %v403 = vmul.f32 %v259, %v77
    %v404 = vmul.f32 %v262, %v78
    %v405 = vadd.f32 %v401, %v402
    %v406 = vadd.f32 %v405, %v403
    %v407 = vadd.f32 %v406, %v404
    %v408 = vrot.slane %v407, 4
    %v409 = vadd.f32 %v407, %v408
    %v410 = vrot.slane %v409, 2
    %v411 = vadd.f32 %v409, %v410
    %v412 = vrot.slane %v411, 1
    %v413 = vadd.f32 %v411, %v412
    %v414 = vmul.f32 %v251, %v79
    %v415 = vmul.f32 %v254, %v80
    %v416 = vmul.f32 %v259, %v81
    %v417 = vmul.f32 %v262, %v82
    %v418 = vadd.f32 %v414, %v415
    %v419 = vadd.f32 %v418, %v416
    %v420 = vadd.f32 %v419, %v417
    %v421 = vrot.slane %v420, 4
    %v422 = vadd.f32 %v420, %v421
    %v423 = vrot.slane %v422, 2
    %v424 = vadd.f32 %v422, %v423
    %v425 = vrot.slane %v424, 1
    %v426 = vadd.f32 %v424, %v425
    %v427 = vmul.f32 %v251, %v83
    %v428 = vmul.f32 %v254, %v84
    %v429 = vmul.f32 %v259, %v85
    %v430 = vmul.f32 %v262, %v86
    %v431 = vadd.f32 %v427, %v428
    %v432 = vadd.f32 %v431, %v429
    %v433 = vadd.f32 %v432, %v430
    %v434 = vrot.slane %v433, 4
    %v435 = vadd.f32 %v433, %v434
    %v436 = vrot.slane %v435, 2
    %v437 = vadd.f32 %v435, %v436
    %v438 = vrot.slane %v437, 1
    %v439 = vadd.f32 %v437, %v438
    %v440 = vmul.f32 %v251, %v87
    %v441 = vmul.f32 %v254, %v88
    %v442 = vmul.f32 %v259, %v89
    %v443 = vmul.f32 %v262, %v90
    %v444 = vadd.f32 %v440, %v441
    %v445 = vadd.f32 %v444, %v442
    %v446 = vadd.f32 %v445, %v443
    %v447 = vrot.slane %v446, 4
    %v448 = vadd.f32 %v446, %v447
    %v449 = vrot.slane %v448, 2
    %v450 = vadd.f32 %v448, %v449
    %v451 = vrot.slane %v450, 1
    %v452 = vadd.f32 %v450, %v451
    %v453 = vmul.f32 %v251, %v91
    %v454 = vmul.f32 %v254, %v92
    %v455 = vmul.f32 %v259, %v93
    %v456 = vmul.f32 %v262, %v94
    %v457 = vadd.f32 %v453, %v454
    %v458 = vadd.f32 %v457, %v455
    %v459 = vadd.f32 %v458, %v456
    %v460 = vrot.slane %v459, 4
    %v461 = vadd.f32 %v459, %v460
    %v462 = vrot.slane %v461, 2
    %v463 = vadd.f32 %v461, %v462
    %v464 = vrot.slane %v463, 1
    %v465 = vadd.f32 %v463, %v464
    %v466 = vmul.f32 %v251, %v95
    %v467 = vmul.f32 %v254, %v96
    %v468 = vmul.f32 %v259, %v97
    %v469 = vmul.f32 %v262, %v98
    %v470 = vadd.f32 %v466, %v467
    %v471 = vadd.f32 %v470, %v468
    %v472 = vadd.f32 %v471, %v469
    %v473 = vrot.slane %v472, 4
    %v474 = vadd.f32 %v472, %v473
    %v475 = vrot.slane %v474, 2
    %v476 = vadd.f32 %v474, %v475
    %v477 = vrot.slane %v476, 1
    %v478 = vadd.f32 %v476, %v477
    %v479 = vmul.f32 %v251, %v99
    %v480 = vmul.f32 %v254, %v100
    %v481 = vmul.f32 %v259, %v101
    %v482 = vmul.f32 %v262, %v102
    %v483 = vadd.f32 %v479, %v480
    %v484 = vadd.f32 %v483, %v481
    %v485 = vadd.f32 %v484, %v482
    %v486 = vrot.slane %v485, 4
    %v487 = vadd.f32 %v485, %v486
    %v488 = vrot.slane %v487, 2
    %v489 = vadd.f32 %v487, %v488
    %v490 = vrot.slane %v489, 1
    %v491 = vadd.f32 %v489, %v490
    %v492 = vmul.f32 %v251, %v103
    %v493 = vmul.f32 %v254, %v104
    %v494 = vmul.f32 %v259, %v105
    %v495 = vmul.f32 %v262, %v106
    %v496 = vadd.f32 %v492, %v493
    %v497 = vadd.f32 %v496, %v494
    %v498 = vadd.f32 %v497, %v495
    %v499 = vrot.slane %v498, 4
    %v500 = vadd.f32 %v498, %v499
    %v501 = vrot.slane %v500, 2
    %v502 = vadd.f32 %v500, %v501
    %v503 = vrot.slane %v502, 1
    %v504 = vadd.f32 %v502, %v503
    %v505 = vmul.f32 %v267, %v75
    %v506 = vmul.f32 %v270, %v76
    %v507 = vmul.f32 %v275, %v77
    %v508 = vmul.f32 %v278, %v78
    %v509 = vadd.f32 %v505, %v506
    %v510 = vadd.f32 %v509, %v507
    %v511 = vadd.f32 %v510, %v508
    %v512 = vrot.slane %v511, 4
    %v513 = vadd.f32 %v511, %v512
    %v514 = vrot.slane %v513, 2
    %v515 = vadd.f32 %v513, %v514
    %v516 = vrot.slane %v515, 1
    %v517 = vadd.f32 %v515, %v516
    %v518 = vmul.f32 %v267, %v79
    %v519 = vmul.f32 %v270, %v80
    %v520 = vmul.f32 %v275, %v81
    %v521 = vmul.f32 %v278, %v82
    %v522 = vadd.f32 %v518, %v519
    %v523 = vadd.f32 %v522, %v520
    %v524 = vadd.f32 %v523, %v521
    %v525 = vrot.slane %v524, 4
    %v526 = vadd.f32 %v524, %v525
    %v527 = vrot.slane %v526, 2
    %v528 = vadd.f32 %v526, %v527
    %v529 = vrot.slane %v528, 1
    %v530 = vadd.f32 %v528, %v529
    %v531 = vmul.f32 %v267, %v83
    %v532 = vmul.f32 %v270, %v84
    %v533 = vmul.f32 %v275, %v85
    %v534 = vmul.f32 %v278, %v86
    %v535 = vadd.f32 %v531, %v532
    %v536 = vadd.f32 %v535, %v533
    %v537 = vadd.f32 %v536, %v534
    %v538 = vrot.slane %v537, 4
    %v539 = vadd.f32 %v537, %v538
    %v540 = vrot.slane %v539, 2
    %v541 = vadd.f32 %v539, %v540
    %v542 = vrot.slane %v541, 1
    %v543 = vadd.f32 %v541, %v542
    %v544 = vmul.f32 %v267, %v87
    %v545 = vmul.f32 %v270, %v88
    %v546 = vmul.f32 %v275, %v89
    %v547 = vmul.f32 %v278, %v90
    %v548 = vadd.f32 %v544, %v545
    %v549 = vadd.f32 %v548, %v546
    %v550 = vadd.f32 %v549, %v547
    %v551 = vrot.slane %v550, 4
    %v552 = vadd.f32 %v550, %v551
    %v553 = vrot.slane %v552, 2
    %v554 = vadd.f32 %v552, %v553
    %v555 = vrot.slane %v554, 1
    %v556 = vadd.f32 %v554, %v555
    %v557 = vmul.f32 %v267, %v91
    %v558 = vmul.f32 %v270, %v92
    %v559 = vmul.f32 %v275, %v93
    %v560 = vmul.f32 %v278, %v94
    %v561 = vadd.f32 %v557, %v558
    %v562 = vadd.f32 %v561, %v559
    %v563 = vadd.f32 %v562, %v560
    %v564 = vrot.slane %v563, 4
    %v565 = vadd.f32 %v563, %v564
    %v566 = vrot.slane %v565, 2
    %v567 = vadd.f32 %v565, %v566
    %v568 = vrot.slane %v567, 1
    %v569 = vadd.f32 %v567, %v568
    %v570 = vmul.f32 %v267, %v95
    %v571 = vmul.f32 %v270, %v96
    %v572 = vmul.f32 %v275, %v97
    %v573 = vmul.f32 %v278, %v98
    %v574 = vadd.f32 %v570, %v571
    %v575 = vadd.f32 %v574, %v572
    %v576 = vadd.f32 %v575, %v573
    %v577 = vrot.slane %v576, 4
    %v578 = vadd.f32 %v576, %v577
    %v579 = vrot.slane %v578, 2
    %v580 = vadd.f32 %v578, %v579
    %v581 = vrot.slane %v580, 1
    %v582 = vadd.f32 %v580, %v581
    %v583 = vmul.f32 %v267, %v99
    %v584 = vmul.f32 %v270, %v100
    %v585 = vmul.f32 %v275, %v101
    %v586 = vmul.f32 %v278, %v102
    %v587 = vadd.f32 %v583, %v584
    %v588 = vadd.f32 %v587, %v585
    %v589 = vadd.f32 %v588, %v586
    %v590 = vrot.slane %v589, 4
    %v591 = vadd.f32 %v589, %v590
    %v592 = vrot.slane %v591, 2
    %v593 = vadd.f32 %v591, %v592
    %v594 = vrot.slane %v593, 1
    %v595 = vadd.f32 %v593, %v594
    %v596 = vmul.f32 %v267, %v103
    %v597 = vmul.f32 %v270, %v104
    %v598 = vmul.f32 %v275, %v105
    %v599 = vmul.f32 %v278, %v106
    %v600 = vadd.f32 %v596, %v597
    %v601 = vadd.f32 %v600, %v598
    %v602 = vadd.f32 %v601, %v599
    %v603 = vrot.slane %v602, 4
    %v604 = vadd.f32 %v602, %v603
    %v605 = vrot.slane %v604, 2
    %v606 = vadd.f32 %v604, %v605
    %v607 = vrot.slane %v606, 1
    %v608 = vadd.f32 %v606, %v607
    %v609 = vmul.f32 %v283, %v75
    %v610 = vmul.f32 %v286, %v76
    %v611 = vmul.f32 %v291, %v77
    %v612 = vmul.f32 %v294, %v78
    %v613 = vadd.f32 %v609, %v610
    %v614 = vadd.f32 %v613, %v611
    %v615 = vadd.f32 %v614, %v612
    %v616 = vrot.slane %v615, 4
    %v617 = vadd.f32 %v615, %v616
    %v618 = vrot.slane %v617, 2
    %v619 = vadd.f32 %v617, %v618
    %v620 = vrot.slane %v619, 1
    %v621 = vadd.f32 %v619, %v620
    %v622 = vmul.f32 %v283, %v79
    %v623 = vmul.f32 %v286, %v80
    %v624 = vmul.f32 %v291, %v81
    %v625 = vmul.f32 %v294, %v82
    %v626 = vadd.f32 %v622, %v623
    %v627 = vadd.f32 %v626, %v624
    %v628 = vadd.f32 %v627, %v625
    %v629 = vrot.slane %v628, 4
    %v630 = vadd.f32 %v628, %v629
    %v631 = vrot.slane %v630, 2
    %v632 = vadd.f32 %v630, %v631
    %v633 = vrot.slane %v632, 1
    %v634 = vadd.f32 %v632, %v633
    %v635 = vmul.f32 %v283, %v83
    %v636 = vmul.f32 %v286, %v84
    %v637 = vmul.f32 %v291, %v85
    %v638 = vmul.f32 %v294, %v86
    %v639 = vadd.f32 %v635, %v636
    %v640 = vadd.f32 %v639, %v637
    %v641 = vadd.f32 %v640, %v638
    %v642 = vrot.slane %v641, 4
    %v643 = vadd.f32 %v641, %v642
    %v644 = vrot.slane %v643, 2
    %v645 = vadd.f32 %v643, %v644
    %v646 = vrot.slane %v645, 1
    %v647 = vadd.f32 %v645, %v646
    %v648 = vmul.f32 %v283, %v87
    %v649 = vmul.f32 %v286, %v88
    %v650 = vmul.f32 %v291, %v89
    %v651 = vmul.f32 %v294, %v90
    %v652 = vadd.f32 %v648, %v649
    %v653 = vadd.f32 %v652, %v650
    %v654 = vadd.f32 %v653, %v651
    %v655 = vrot.slane %v654, 4
    %v656 = vadd.f32 %v654, %v655
    %v657 = vrot.slane %v656, 2
    %v658 = vadd.f32 %v656, %v657
    %v659 = vrot.slane %v658, 1
    %v660 = vadd.f32 %v658, %v659
    %v661 = vmul.f32 %v283, %v91
    %v662 = vmul.f32 %v286, %v92
    %v663 = vmul.f32 %v291, %v93
    %v664 = vmul.f32 %v294, %v94
    %v665 = vadd.f32 %v661, %v662
    %v666 = vadd.f32 %v665, %v663
    %v667 = vadd.f32 %v666, %v664
    %v668 = vrot.slane %v667, 4
    %v669 = vadd.f32 %v667, %v668
    %v670 = vrot.slane %v669, 2
    %v671 = vadd.f32 %v669, %v670
    %v672 = vrot.slane %v671, 1
    %v673 = vadd.f32 %v671, %v672
    %v674 = vmul.f32 %v283, %v95
    %v675 = vmul.f32 %v286, %v96
    %v676 = vmul.f32 %v291, %v97
    %v677 = vmul.f32 %v294, %v98
    %v678 = vadd.f32 %v674, %v675
    %v679 = vadd.f32 %v678, %v676
    %v680 = vadd.f32 %v679, %v677
    %v681 = vrot.slane %v680, 4
    %v682 = vadd.f32 %v680, %v681
    %v683 = vrot.slane %v682, 2
    %v684 = vadd.f32 %v682, %v683
    %v685 = vrot.slane %v684, 1
    %v686 = vadd.f32 %v684, %v685
    %v687 = vmul.f32 %v283, %v99
    %v688 = vmul.f32 %v286, %v100
    %v689 = vmul.f32 %v291, %v101
    %v690 = vmul.f32 %v294, %v102
    %v691 = vadd.f32 %v687, %v688
    %v692 = vadd.f32 %v691, %v689
    %v693 = vadd.f32 %v692, %v690
    %v694 = vrot.slane %v693, 4
    %v695 = vadd.f32 %v693, %v694
    %v696 = vrot.slane %v695, 2
    %v697 = vadd.f32 %v695, %v696
    %v698 = vrot.slane %v697, 1
    %v699 = vadd.f32 %v697, %v698
    %v700 = vmul.f32 %v283, %v103
    %v701 = vmul.f32 %v286, %v104
    %v702 = vmul.f32 %v291, %v105
    %v703 = vmul.f32 %v294, %v106
    %v704 = vadd.f32 %v700, %v701
    %v705 = vadd.f32 %v704, %v702
    %v706 = vadd.f32 %v705, %v703
    %v707 = vrot.slane %v706, 4
    %v708 = vadd.f32 %v706, %v707
    %v709 = vrot.slane %v708, 2
    %v710 = vadd.f32 %v708, %v709
    %v711 = vrot.slane %v710, 1
    %v712 = vadd.f32 %v710, %v711
    %v713 = vmax.f32 %v309, %v322
    %v714 = vmax.f32 %v713, %v335
    %v715 = vmax.f32 %v714, %v348
    %v716 = vmax.f32 %v715, %v361
    %v717 = vmax.f32 %v716, %v374
    %v718 = vmax.f32 %v717, %v387
    %v719 = vmax.f32 %v718, %v400
    %v720 = vsub.f32 %v309, %v719
    %v721 = vmul.f32 %v720, 1.442695
    %v722 = vpow.pop %v721
    %v723 = vsub.f32 %v322, %v719
    %v724 = vmul.f32 %v723, 1.442695
    %v725 = vpow.pop %v724
    %v726 = vadd.f32 %v722, %v725
    %v727 = vsub.f32 %v335, %v719
    %v728 = vmul.f32 %v727, 1.442695
    %v729 = vpow.pop %v728
    %v730 = vadd.f32 %v726, %v729
    %v731 = vsub.f32 %v348, %v719
    %v732 = vmul.f32 %v731, 1.442695
    %v733 = vpow.pop %v732
    %v734 = vadd.f32 %v730, %v733
    %v735 = vsub.f32 %v361, %v719
    %v736 = vmul.f32 %v735, 1.442695
    %v737 = vpow.pop %v736
    %v738 = vadd.f32 %v734, %v737
    %v739 = vsub.f32 %v374, %v719
    %v740 = vmul.f32 %v739, 1.442695
    %v741 = vpow.pop %v740
    %v742 = vadd.f32 %v738, %v741
    %v743 = vsub.f32 %v387, %v719
    %v744 = vmul.f32 %v743, 1.442695
    %v745 = vpow.pop %v744
    %v746 = vadd.f32 %v742, %v745
    %v747 = vsub.f32 %v400, %v719
    %v748 = vmul.f32 %v747, 1.442695
    %v749 = vpow.pop %v748
    %v750 = vadd.f32 %v746, %v749
    %v751 = vrcp.pop %v750
    %v752 = vmul.f32 1.0, %v751
    %v753 = vmax.f32 %v413, %v426
    %v754 = vmax.f32 %v753, %v439
    %v755 = vmax.f32 %v754, %v452
    %v756 = vmax.f32 %v755, %v465
    %v757 = vmax.f32 %v756, %v478
    %v758 = vmax.f32 %v757, %v491
    %v759 = vmax.f32 %v758, %v504
    %v760 = vsub.f32 %v413, %v759
    %v761 = vmul.f32 %v760, 1.442695
    %v762 = vpow.pop %v761
    %v763 = vsub.f32 %v426, %v759
    %v764 = vmul.f32 %v763, 1.442695
    %v765 = vpow.pop %v764
    %v766 = vadd.f32 %v762, %v765
    %v767 = vsub.f32 %v439, %v759
    %v768 = vmul.f32 %v767, 1.442695
    %v769 = vpow.pop %v768
    %v770 = vadd.f32 %v766, %v769
    %v771 = vsub.f32 %v452, %v759
    %v772 = vmul.f32 %v771, 1.442695
    %v773 = vpow.pop %v772
    %v774 = vadd.f32 %v770, %v773
    %v775 = vsub.f32 %v465, %v759
    %v776 = vmul.f32 %v775, 1.442695
    %v777 = vpow.pop %v776
    %v778 = vadd.f32 %v774, %v777
    %v779 = vsub.f32 %v478, %v759
    %v780 = vmul.f32 %v779, 1.442695
    %v781 = vpow.pop %v780
    %v782 = vadd.f32 %v778, %v781
    %v783 = vsub.f32 %v491, %v759
    %v784 = vmul.f32 %v783, 1.442695
    %v785 = vpow.pop %v784
    %v786 = vadd.f32 %v782, %v785
    %v787 = vsub.f32 %v504, %v759
    %v788 = vmul.f32 %v787, 1.442695
    %v789 = vpow.pop %v788
    %v790 = vadd.f32 %v786, %v789
    %v791 = vrcp.pop %v790
    %v792 = vmul.f32 1.0, %v791
    %v793 = vmax.f32 %v517, %v530
    %v794 = vmax.f32 %v793, %v543
    %v795 = vmax.f32 %v794, %v556
    %v796 = vmax.f32 %v795, %v569
    %v797 = vmax.f32 %v796, %v582
    %v798 = vmax.f32 %v797, %v595
    %v799 = vmax.f32 %v798, %v608
    %v800 = vsub.f32 %v517, %v799
    %v801 = vmul.f32 %v800, 1.442695
    %v802 = vpow.pop %v801
    %v803 = vsub.f32 %v530, %v799
    %v804 = vmul.f32 %v803, 1.442695
    %v805 = vpow.pop %v804
    %v806 = vadd.f32 %v802, %v805
    %v807 = vsub.f32 %v543, %v799
    %v808 = vmul.f32 %v807, 1.442695
    %v809 = vpow.pop %v808
    %v810 = vadd.f32 %v806, %v809
    %v811 = vsub.f32 %v556, %v799
    %v812 = vmul.f32 %v811, 1.442695
    %v813 = vpow.pop %v812
    %v814 = vadd.f32 %v810, %v813
    %v815 = vsub.f32 %v569, %v799
    %v816 = vmul.f32 %v815, 1.442695
    %v817 = vpow.pop %v816
    %v818 = vadd.f32 %v814, %v817
    %v819 = vsub.f32 %v582, %v799
    %v820 = vmul.f32 %v819, 1.442695
    %v821 = vpow.pop %v820
    %v822 = vadd.f32 %v818, %v821
    %v823 = vsub.f32 %v595, %v799
    %v824 = vmul.f32 %v823, 1.442695
    %v825 = vpow.pop %v824
    %v826 = vadd.f32 %v822, %v825
    %v827 = vsub.f32 %v608, %v799
    %v828 = vmul.f32 %v827, 1.442695
    %v829 = vpow.pop %v828
    %v830 = vadd.f32 %v826, %v829
    %v831 = vrcp.pop %v830
    %v832 = vmul.f32 1.0, %v831
    %v833 = vmax.f32 %v621, %v634
    %v834 = vmax.f32 %v833, %v647
    %v835 = vmax.f32 %v834, %v660
    %v836 = vmax.f32 %v835, %v673
    %v837 = vmax.f32 %v836, %v686
    %v838 = vmax.f32 %v837, %v699
    %v839 = vmax.f32 %v838, %v712
    %v840 = vsub.f32 %v621, %v839
    %v841 = vmul.f32 %v840, 1.442695
    %v842 = vpow.pop %v841
    %v843 = vsub.f32 %v634, %v839
    %v844 = vmul.f32 %v843, 1.442695
    %v845 = vpow.pop %v844
    %v846 = vadd.f32 %v842, %v845
    %v847 = vsub.f32 %v647, %v839
    %v848 = vmul.f32 %v847, 1.442695
    %v849 = vpow.pop %v848
    %v850 = vadd.f32 %v846, %v849
    %v851 = vsub.f32 %v660, %v839
    %v852 = vmul.f32 %v851, 1.442695
    %v853 = vpow.pop %v852
    %v854 = vadd.f32 %v850, %v853
    %v855 = vsub.f32 %v673, %v839
    %v856 = vmul.f32 %v855, 1.442695
    %v857 = vpow.pop %v856
    %v858 = vadd.f32 %v854, %v857
    %v859 = vsub.f32 %v686, %v839
    %v860 = vmul.f32 %v859, 1.442695
    %v861 = vpow.pop %v860
    %v862 = vadd.f32 %v858, %v861
    %v863 = vsub.f32 %v699, %v839
    %v864 = vmul.f32 %v863, 1.442695
    %v865 = vpow.pop %v864
    %v866 = vadd.f32 %v862, %v865
    %v867 = vsub.f32 %v712, %v839
    %v868 = vmul.f32 %v867, 1.442695
    %v869 = vpow.pop %v868
    %v870 = vadd.f32 %v866, %v869
    %v871 = vrcp.pop %v870
    %v872 = vmul.f32 1.0, %v871
    %v873 = vmul.f32 %v722, %v752
    %v874 = vmul.f32 %v762, %v792
    %v875 = vadd.f32 %v873, %v874
    %v876 = vmul.f32 %v802, %v832
    %v877 = vadd.f32 %v875, %v876
    %v878 = vmul.f32 %v842, %v872
    %v879 = vadd.f32 %v877, %v878
    %v880 = vmul.f32 %v879, 0.25
    %v881 = vmul.f32 %v725, %v752
    %v882 = vmul.f32 %v765, %v792
    %v883 = vadd.f32 %v881, %v882
    %v884 = vmul.f32 %v805, %v832
    %v885 = vadd.f32 %v883, %v884
    %v886 = vmul.f32 %v845, %v872
    %v887 = vadd.f32 %v885, %v886
    %v888 = vmul.f32 %v887, 0.25
    %v889 = vmul.f32 %v729, %v752
    %v890 = vmul.f32 %v769, %v792
    %v891 = vadd.f32 %v889, %v890
    %v892 = vmul.f32 %v809, %v832
    %v893 = vadd.f32 %v891, %v892
    %v894 = vmul.f32 %v849, %v872
    %v895 = vadd.f32 %v893, %v894
    %v896 = vmul.f32 %v895, 0.25
    %v897 = vmul.f32 %v733, %v752
    %v898 = vmul.f32 %v773, %v792
    %v899 = vadd.f32 %v897, %v898
    %v900 = vmul.f32 %v813, %v832
    %v901 = vadd.f32 %v899, %v900
    %v902 = vmul.f32 %v853, %v872
    %v903 = vadd.f32 %v901, %v902
    %v904 = vmul.f32 %v903, 0.25
    %v905 = vmul.f32 %v737, %v752
    %v906 = vmul.f32 %v777, %v792
    %v907 = vadd.f32 %v905, %v906
    %v908 = vmul.f32 %v817, %v832
    %v909 = vadd.f32 %v907, %v908
    %v910 = vmul.f32 %v857, %v872
    %v911 = vadd.f32 %v909, %v910
    %v912 = vmul.f32 %v911, 0.25
    %v913 = vmul.f32 %v741, %v752
    %v914 = vmul.f32 %v781, %v792
    %v915 = vadd.f32 %v913, %v914
    %v916 = vmul.f32 %v821, %v832
    %v917 = vadd.f32 %v915, %v916
    %v918 = vmul.f32 %v861, %v872
    %v919 = vadd.f32 %v917, %v918
    %v920 = vmul.f32 %v919, 0.25
    %v921 = vmul.f32 %v745, %v752
    %v922 = vmul.f32 %v785, %v792
    %v923 = vadd.f32 %v921, %v922
    %v924 = vmul.f32 %v825, %v832
    %v925 = vadd.f32 %v923, %v924
    %v926 = vmul.f32 %v865, %v872
    %v927 = vadd.f32 %v925, %v926
    %v928 = vmul.f32 %v927, 0.25
    %v929 = vmul.f32 %v749, %v752
    %v930 = vmul.f32 %v789, %v792
    %v931 = vadd.f32 %v929, %v930
    %v932 = vmul.f32 %v829, %v832
    %v933 = vadd.f32 %v931, %v932
    %v934 = vmul.f32 %v869, %v872
    %v935 = vadd.f32 %v933, %v934
    %v936 = vmul.f32 %v935, 0.25
    %vm937 = vcmask 1040384
    %v938 = vsel %vm937, %v880, %v888
    %vm939 = vcmask 1041408
    %v940 = vsel %vm939, %v938, %v896
    %vm941 = vcmask 1042432
    %v942 = vsel %vm941, %v940, %v904
    %vm943 = vcmask 1043456
    %v944 = vsel %vm943, %v942, %v912
    %vm945 = vcmask 1044480
    %v946 = vsel %vm945, %v944, %v920
    %vm947 = vcmask 1045504
    %v948 = vsel %vm947, %v946, %v928
    %vm949 = vcmask 1046528
    %v950 = vsel %vm949, %v948, %v936
    %951 = vst [vmem:[#allocation6] sm:$0xff] %v950
    %v952 = vmul.f32 %v722, %v75
    %v953 = vmul.f32 %v722, %v76
    %v954 = vmul.f32 %v722, %v77
    %v955 = vmul.f32 %v722, %v78
    %v956 = vmul.f32 %v725, %v79
    %v957 = vmul.f32 %v725, %v80
    %v958 = vmul.f32 %v725, %v81
    %v959 = vmul.f32 %v725, %v82
    %v960 = vadd.f32 %v952, %v956
    %v961 = vadd.f32 %v953, %v957
    %v962 = vadd.f32 %v954, %v958
    %v963 = vadd.f32 %v955, %v959
    %v964 = vmul.f32 %v729, %v83
    %v965 = vmul.f32 %v729, %v84
    %v966 = vmul.f32 %v729, %v85
    %v967 = vmul.f32 %v729, %v86
    %v968 = vadd.f32 %v960, %v964
    %v969 = vadd.f32 %v961, %v965
    %v970 = vadd.f32 %v962, %v966
    %v971 = vadd.f32 %v963, %v967
    %v972 = vmul.f32 %v733, %v87
    %v973 = vmul.f32 %v733, %v88
    %v974 = vmul.f32 %v733, %v89
    %v975 = vmul.f32 %v733, %v90
    %v976 = vadd.f32 %v968, %v972
    %v977 = vadd.f32 %v969, %v973
    %v978 = vadd.f32 %v970, %v974
    %v979 = vadd.f32 %v971, %v975
    %v980 = vmul.f32 %v737, %v91
    %v981 = vmul.f32 %v737, %v92
    %v982 = vmul.f32 %v737, %v93
    %v983 = vmul.f32 %v737, %v94
    %v984 = vadd.f32 %v976, %v980
    %v985 = vadd.f32 %v977, %v981
    %v986 = vadd.f32 %v978, %v982
    %v987 = vadd.f32 %v979, %v983
    %v988 = vmul.f32 %v741, %v95
    %v989 = vmul.f32 %v741, %v96
    %v990 = vmul.f32 %v741, %v97
    %v991 = vmul.f32 %v741, %v98
    %v992 = vadd.f32 %v984, %v988
    %v993 = vadd.f32 %v985, %v989
    %v994 = vadd.f32 %v986, %v990
    %v995 = vadd.f32 %v987, %v991
    %v996 = vmul.f32 %v745, %v99
    %v997 = vmul.f32 %v745, %v100
    %v998 = vmul.f32 %v745, %v101
    %v999 = vmul.f32 %v745, %v102
    %v1000 = vadd.f32 %v992, %v996
    %v1001 = vadd.f32 %v993, %v997
    %v1002 = vadd.f32 %v994, %v998
    %v1003 = vadd.f32 %v995, %v999
    %v1004 = vmul.f32 %v749, %v103
    %v1005 = vmul.f32 %v749, %v104
    %v1006 = vmul.f32 %v749, %v105
    %v1007 = vmul.f32 %v749, %v106
    %v1008 = vadd.f32 %v1000, %v1004
    %v1009 = vadd.f32 %v1001, %v1005
    %v1010 = vadd.f32 %v1002, %v1006
    %v1011 = vadd.f32 %v1003, %v1007
    %v1012 = vmul.f32 %v1008, %v752
    %v1013 = vmul.f32 %v1009, %v752
    %v1014 = vmul.f32 %v1010, %v752
    %v1015 = vmul.f32 %v1011, %v752
    %v1016 = vmul.f32 %v762, %v75
    %v1017 = vmul.f32 %v762, %v76
    %v1018 = vmul.f32 %v762, %v77
    %v1019 = vmul.f32 %v762, %v78
    %v1020 = vmul.f32 %v765, %v79
    %v1021 = vmul.f32 %v765, %v80
    %v1022 = vmul.f32 %v765, %v81
    %v1023 = vmul.f32 %v765, %v82
    %v1024 = vadd.f32 %v1016, %v1020
    %v1025 = vadd.f32 %v1017, %v1021
    %v1026 = vadd.f32 %v1018, %v1022
    %v1027 = vadd.f32 %v1019, %v1023
    %v1028 = vmul.f32 %v769, %v83
    %v1029 = vmul.f32 %v769, %v84
    %v1030 = vmul.f32 %v769, %v85
    %v1031 = vmul.f32 %v769, %v86
    %v1032 = vadd.f32 %v1024, %v1028
    %v1033 = vadd.f32 %v1025, %v1029
    %v1034 = vadd.f32 %v1026, %v1030
    %v1035 = vadd.f32 %v1027, %v1031
    %v1036 = vmul.f32 %v773, %v87
    %v1037 = vmul.f32 %v773, %v88
    %v1038 = vmul.f32 %v773, %v89
    %v1039 = vmul.f32 %v773, %v90
    %v1040 = vadd.f32 %v1032, %v1036
    %v1041 = vadd.f32 %v1033, %v1037
    %v1042 = vadd.f32 %v1034, %v1038
    %v1043 = vadd.f32 %v1035, %v1039
    %v1044 = vmul.f32 %v777, %v91
    %v1045 = vmul.f32 %v777, %v92
    %v1046 = vmul.f32 %v777, %v93
    %v1047 = vmul.f32 %v777, %v94
    %v1048 = vadd.f32 %v1040, %v1044
    %v1049 = vadd.f32 %v1041, %v1045
    %v1050 = vadd.f32 %v1042, %v1046
    %v1051 = vadd.f32 %v1043, %v1047
    %v1052 = vmul.f32 %v781, %v95
    %v1053 = vmul.f32 %v781, %v96
    %v1054 = vmul.f32 %v781, %v97
    %v1055 = vmul.f32 %v781, %v98
    %v1056 = vadd.f32 %v1048, %v1052
    %v1057 = vadd.f32 %v1049, %v1053
    %v1058 = vadd.f32 %v1050, %v1054
    %v1059 = vadd.f32 %v1051, %v1055
    %v1060 = vmul.f32 %v785, %v99
    %v1061 = vmul.f32 %v785, %v100
    %v1062 = vmul.f32 %v785, %v101
    %v1063 = vmul.f32 %v785, %v102
    %v1064 = vadd.f32 %v1056, %v1060
    %v1065 = vadd.f32 %v1057, %v1061
    %v1066 = vadd.f32 %v1058, %v1062
    %v1067 = vadd.f32 %v1059, %v1063
    %v1068 = vmul.f32 %v789, %v103
    %v1069 = vmul.f32 %v789, %v104
    %v1070 = vmul.f32 %v789, %v105
    %v1071 = vmul.f32 %v789, %v106
    %v1072 = vadd.f32 %v1064, %v1068
    %v1073 = vadd.f32 %v1065, %v1069
    %v1074 = vadd.f32 %v1066, %v1070
    %v1075 = vadd.f32 %v1067, %v1071
    %v1076 = vmul.f32 %v1072, %v792
    %v1077 = vmul.f32 %v1073, %v792
    %v1078 = vmul.f32 %v1074, %v792
    %v1079 = vmul.f32 %v1075, %v792
    %v1080 = vmul.f32 %v802, %v75
    %v1081 = vmul.f32 %v802, %v76
    %v1082 = vmul.f32 %v802, %v77
    %v1083 = vmul.f32 %v802, %v78
    %v1084 = vmul.f32 %v805, %v79
    %v1085 = vmul.f32 %v805, %v80
    %v1086 = vmul.f32 %v805, %v81
    %v1087 = vmul.f32 %v805, %v82
    %v1088 = vadd.f32 %v1080, %v1084
    %v1089 = vadd.f32 %v1081, %v1085
    %v1090 = vadd.f32 %v1082, %v1086
    %v1091 = vadd.f32 %v1083, %v1087
    %v1092 = vmul.f32 %v809, %v83
    %v1093 = vmul.f32 %v809, %v84
    %v1094 = vmul.f32 %v809, %v85
    %v1095 = vmul.f32 %v809, %v86
    %v1096 = vadd.f32 %v1088, %v1092
    %v1097 = vadd.f32 %v1089, %v1093
    %v1098 = vadd.f32 %v1090, %v1094
    %v1099 = vadd.f32 %v1091, %v1095
    %v1100 = vmul.f32 %v813, %v87
    %v1101 = vmul.f32 %v813, %v88
    %v1102 = vmul.f32 %v813, %v89
    %v1103 = vmul.f32 %v813, %v90
    %v1104 = vadd.f32 %v1096, %v1100
    %v1105 = vadd.f32 %v1097, %v1101
    %v1106 = vadd.f32 %v1098, %v1102
    %v1107 = vadd.f32 %v1099, %v1103
    %v1108 = vmul.f32 %v817, %v91
    %v1109 = vmul.f32 %v817, %v92
    %v1110 = vmul.f32 %v817, %v93
    %v1111 = vmul.f32 %v817, %v94
    %v1112 = vadd.f32 %v1104, %v1108
    %v1113 = vadd.f32 %v1105, %v1109
    %v1114 = vadd.f32 %v1106, %v1110
    %v1115 = vadd.f32 %v1107, %v1111
    %v1116 = vmul.f32 %v821, %v95
    %v1117 = vmul.f32 %v821, %v96
    %v1118 = vmul.f32 %v821, %v97
    %v1119 = vmul.f32 %v821, %v98
    %v1120 = vadd.f32 %v1112, %v1116
    %v1121 = vadd.f32 %v1113, %v1117
    %v1122 = vadd.f32 %v1114, %v1118
    %v1123 = vadd.f32 %v1115, %v1119
    %v1124 = vmul.f32 %v825, %v99
    %v1125 = vmul.f32 %v825, %v100
    %v1126 = vmul.f32 %v825, %v101
    %v1127 = vmul.f32 %v825, %v102
    %v1128 = vadd.f32 %v1120, %v1124
    %v1129 = vadd.f32 %v1121, %v1125
    %v1130 = vadd.f32 %v1122, %v1126
    %v1131 = vadd.f32 %v1123, %v1127
    %v1132 = vmul.f32 %v829, %v103
    %v1133 = vmul.f32 %v829, %v104
    %v1134 = vmul.f32 %v829, %v105
    %v1135 = vmul.f32 %v829, %v106
    %v1136 = vadd.f32 %v1128, %v1132
    %v1137 = vadd.f32 %v1129, %v1133
    %v1138 = vadd.f32 %v1130, %v1134
    %v1139 = vadd.f32 %v1131, %v1135
    %v1140 = vmul.f32 %v1136, %v832
    %v1141 = vmul.f32 %v1137, %v832
    %v1142 = vmul.f32 %v1138, %v832
    %v1143 = vmul.f32 %v1139, %v832
    %v1144 = vmul.f32 %v842, %v75
    %v1145 = vmul.f32 %v842, %v76
    %v1146 = vmul.f32 %v842, %v77
    %v1147 = vmul.f32 %v842, %v78
    %v1148 = vmul.f32 %v845, %v79
    %v1149 = vmul.f32 %v845, %v80
    %v1150 = vmul.f32 %v845, %v81
    %v1151 = vmul.f32 %v845, %v82
    %v1152 = vadd.f32 %v1144, %v1148
    %v1153 = vadd.f32 %v1145, %v1149
    %v1154 = vadd.f32 %v1146, %v1150
    %v1155 = vadd.f32 %v1147, %v1151
    %v1156 = vmul.f32 %v849, %v83
    %v1157 = vmul.f32 %v849, %v84
    %v1158 = vmul.f32 %v849, %v85
    %v1159 = vmul.f32 %v849, %v86
    %v1160 = vadd.f32 %v1152, %v1156
    %v1161 = vadd.f32 %v1153, %v1157
    %v1162 = vadd.f32 %v1154, %v1158
    %v1163 = vadd.f32 %v1155, %v1159
    %v1164 = vmul.f32 %v853, %v87
    %v1165 = vmul.f32 %v853, %v88
    %v1166 = vmul.f32 %v853, %v89
    %v1167 = vmul.f32 %v853, %v90
    %v1168 = vadd.f32 %v1160, %v1164
    %v1169 = vadd.f32 %v1161, %v1165
    %v1170 = vadd.f32 %v1162, %v1166
    %v1171 = vadd.f32 %v1163, %v1167
    %v1172 = vmul.f32 %v857, %v91
    %v1173 = vmul.f32 %v857, %v92
    %v1174 = vmul.f32 %v857, %v93
    %v1175 = vmul.f32 %v857, %v94
    %v1176 = vadd.f32 %v1168, %v1172
    %v1177 = vadd.f32 %v1169, %v1173
    %v1178 = vadd.f32 %v1170, %v1174
    %v1179 = vadd.f32 %v1171, %v1175
    %v1180 = vmul.f32 %v861, %v95
    %v1181 = vmul.f32 %v861, %v96
    %v1182 = vmul.f32 %v861, %v97
    %v1183 = vmul.f32 %v861, %v98
    %v1184 = vadd.f32 %v1176, %v1180
    %v1185 = vadd.f32 %v1177, %v1181
    %v1186 = vadd.f32 %v1178, %v1182
    %v1187 = vadd.f32 %v1179, %v1183
    %v1188 = vmul.f32 %v865, %v99
    %v1189 = vmul.f32 %v865, %v100
    %v1190 = vmul.f32 %v865, %v101
    %v1191 = vmul.f32 %v865, %v102
    %v1192 = vadd.f32 %v1184, %v1188
    %v1193 = vadd.f32 %v1185, %v1189
    %v1194 = vadd.f32 %v1186, %v1190
    %v1195 = vadd.f32 %v1187, %v1191
    %v1196 = vmul.f32 %v869, %v103
    %v1197 = vmul.f32 %v869, %v104
    %v1198 = vmul.f32 %v869, %v105
    %v1199 = vmul.f32 %v869, %v106
    %v1200 = vadd.f32 %v1192, %v1196
    %v1201 = vadd.f32 %v1193, %v1197
    %v1202 = vadd.f32 %v1194, %v1198
    %v1203 = vadd.f32 %v1195, %v1199
    %v1204 = vmul.f32 %v1200, %v872
    %v1205 = vmul.f32 %v1201, %v872
    %v1206 = vmul.f32 %v1202, %v872
    %v1207 = vmul.f32 %v1203, %v872
    %v1208 = vld [vmem:[%s3] sm:$0xf]
    %v1209 = vld [vmem:[%s3 + $0x4] sm:$0xf]
    %v1210 = vld [vmem:[%s3 + $0x8] sm:$0xf]
    %v1211 = vld [vmem:[%s3 + $0xc] sm:$0xf]
    %v1212 = vpack.c.bf16 %v1013, %v1012
    %v1213 = vpack.c.bf16 %v1015, %v1014
    %v1214 = vpack.c.bf16 %v1077, %v1076
    %v1215 = vpack.c.bf16 %v1079, %v1078
    %v1216 = vpack.c.bf16 %v1141, %v1140
    %v1217 = vpack.c.bf16 %v1143, %v1142
    %v1218 = vpack.c.bf16 %v1205, %v1204
    %v1219 = vpack.c.bf16 %v1207, %v1206
    %v1220 = vld [vmem:[%s4] sm:$0xf]
    %v1221 = vld [vmem:[%s4 + $0x4] sm:$0xf]
    %v1222 = vld [vmem:[%s4 + $0x8] sm:$0xf]
    %v1223 = vld [vmem:[%s4 + $0xc] sm:$0xf]
    %v1228 = vunpack.c.l.b16 %v1220
    %v1229 = vunpack.c.l.b16 %v1221
    %v1230 = vunpack.c.l.b16 %v1222
    %v1231 = vunpack.c.l.b16 %v1223
    %v1232 = vpack.c.b16 %v1229, %v1228
    %v1233 = vpack.c.b16 %v1231, %v1230
    %v1235 = vsel %vm175, %v1232, 0
    %v1238 = vsel %vm175, %v1233, 0
    %1240 = vmatprep.subr.bf16.mxu0 0
    %1241 = vmatpush1.bf16.msra.mxu0 %v171
    %1242 = vmatprep.subr.bf16.mxu0 0
    %1243 = vmatpush1.bf16.msra.mxu0 %v172
    %1244 = vmatprep.subr.bf16.mxu0 0
    %1245 = vmatpush1.bf16.msra.mxu0 0
    %1246 = vmatprep.subr.bf16.mxu0 0
    %1247 = vmatpush1.bf16.msra.mxu0 0
    %1248 = vmatprep.subr.bf16.mxu0 0
    %1249 = vmatpush1.bf16.msra.mxu0 0
    %1250 = vmatprep.subr.bf16.mxu0 0
    %1251 = vmatpush1.bf16.msra.mxu0 0
    %1252 = vmatprep.subr.bf16.mxu0 0
    %1253 = vmatpush1.bf16.msra.mxu0 0
    %1254 = vmatprep.subr.bf16.mxu0 0
    %1255 = vmatpush1.bf16.msra.mxu0 0
    %1256 = vmatprep.subr.bf16.mxu0 0
    %1257 = vmatpush1.bf16.msra.mxu0 0
    %1258 = vmatprep.subr.bf16.mxu0 0
    %1259 = vmatpush1.bf16.msra.mxu0 0
    %1260 = vmatprep.subr.bf16.mxu0 0
    %1261 = vmatpush1.bf16.msra.mxu0 0
    %1262 = vmatprep.subr.bf16.mxu0 0
    %1263 = vmatpush1.bf16.msra.mxu0 0
    %1264 = vmatprep.subr.bf16.mxu0 0
    %1265 = vmatpush1.bf16.msra.mxu0 0
    %1266 = vmatprep.subr.bf16.mxu0 0
    %1267 = vmatpush1.bf16.msra.mxu0 0
    %1268 = vmatprep.subr.bf16.mxu0 0
    %1269 = vmatpush1.bf16.msra.mxu0 0
    %1270 = vmatprep.subr.bf16.mxu0 0
    %1271 = vmatpush1.bf16.msra.mxu0 0
    %1272 = vmatprep.mubr.bf16.mxu0 0
    %1273 = vmatmul.mubr.bf16.gmra.mrb[0].mxu0 %v1235
    %v1274 = vpop.f32.mrb[0].mxu0
    %v1275 = vadd.f32 0.0, %v1274
    %v1276 = vpop.f32.mrb[0].mxu0
    %v1277 = vpop.f32.mrb[0].mxu0
    %v1278 = vadd.f32 0.0, %v1277
    %v1279 = vpop.f32.mrb[0].mxu0
    %1280 = vmatprep.mubr.bf16.mxu0 0
    %1281 = vmatmul.mubr.bf16.gmra.mrb[0].mxu0 %v1238
    %v1282 = vpop.f32.mrb[0].mxu0
    %v1283 = vadd.f32 0.0, %v1282
    %v1284 = vpop.f32.mrb[0].mxu0
    %v1285 = vpop.f32.mrb[0].mxu0
    %v1286 = vadd.f32 0.0, %v1285
    %v1287 = vpop.f32.mrb[0].mxu0
    %1288 = vdwg.mxu0
    %v1293 = vunpack.c.l.b16 %v1208
    %v1294 = vunpack.c.l.b16 %v1209
    %v1295 = vunpack.c.l.b16 %v1210
    %v1296 = vunpack.c.l.b16 %v1211
    %v1297 = vpack.c.b16 %v1294, %v1293
    %v1298 = vpack.c.b16 %v1296, %v1295
    %1301 = vmatprep.subr.bf16.mxu0 0
    %1302 = vmatpush1.bf16.msra.mxu0 %v1212
    %1303 = vmatprep.subr.bf16.mxu0 0
    %1304 = vmatpush1.bf16.msra.mxu0 %v1213
    %1305 = vmatprep.subr.bf16.mxu0 0
    %1306 = vmatpush1.bf16.msra.mxu0 %v1214
    %1307 = vmatprep.subr.bf16.mxu0 0
    %1308 = vmatpush1.bf16.msra.mxu0 %v1215
    %1309 = vmatprep.subr.bf16.mxu0 0
    %1310 = vmatpush1.bf16.msra.mxu0 %v1216
    %1311 = vmatprep.subr.bf16.mxu0 0
    %1312 = vmatpush1.bf16.msra.mxu0 %v1217
    %1313 = vmatprep.subr.bf16.mxu0 0
    %1314 = vmatpush1.bf16.msra.mxu0 %v1218
    %1315 = vmatprep.subr.bf16.mxu0 0
    %1316 = vmatpush1.bf16.msra.mxu0 %v1219
    %1317 = vmatprep.subr.bf16.mxu0 0
    %1318 = vmatpush1.bf16.msra.mxu0 0
    %1319 = vmatprep.subr.bf16.mxu0 0
    %1320 = vmatpush1.bf16.msra.mxu0 0
    %1321 = vmatprep.subr.bf16.mxu0 0
    %1322 = vmatpush1.bf16.msra.mxu0 0
    %1323 = vmatprep.subr.bf16.mxu0 0
    %1324 = vmatpush1.bf16.msra.mxu0 0
    %1325 = vmatprep.subr.bf16.mxu0 0
    %1326 = vmatpush1.bf16.msra.mxu0 0
    %1327 = vmatprep.subr.bf16.mxu0 0
    %1328 = vmatpush1.bf16.msra.mxu0 0
    %1329 = vmatprep.subr.bf16.mxu0 0
    %1330 = vmatpush1.bf16.msra.mxu0 0
    %1331 = vmatprep.subr.bf16.mxu0 0
    %1332 = vmatpush1.bf16.msra.mxu0 0
    %1333 = vmatprep.mubr.bf16.mxu0 0
    %1334 = vmatmul.mubr.bf16.gmra.mrb[0].mxu0 %v1297
    %v1335 = vpop.f32.mrb[0].mxu0
    %v1336 = vadd.f32 %v1275, %v1335
    %v1337 = vpop.f32.mrb[0].mxu0
    %v1338 = vpop.f32.mrb[0].mxu0
    %v1339 = vadd.f32 %v1278, %v1338
    %v1340 = vpop.f32.mrb[0].mxu0
    %1341 = vmatprep.mubr.bf16.mxu0 0
    %1342 = vmatmul.mubr.bf16.gmra.mrb[0].mxu0 %v1298
    %v1343 = vpop.f32.mrb[0].mxu0
    %v1344 = vadd.f32 %v1283, %v1343
    %v1345 = vpop.f32.mrb[0].mxu0
    %v1346 = vpop.f32.mrb[0].mxu0
    %v1347 = vadd.f32 %v1286, %v1346
    %v1348 = vpop.f32.mrb[0].mxu0
    %1349 = vdwg.mxu0
    %v1350 = vtanh.pop %v1336
    %v1351 = vtanh.pop %v1339
    %v1352 = vtanh.pop %v1344
    %v1353 = vtanh.pop %v1347
    %1354 = vst [vmem:[#allocation5] sm:$0xff] %v1350
    %1355 = vst [vmem:[#allocation5 + $0x8] sm:$0xff] %v1351
    %1356 = vst [vmem:[#allocation5 + $0x10] sm:$0xff] %v1352
    %1357 = vst [vmem:[#allocation5 + $0x18] sm:$0xff] %v1353
    // Predicated region
    $region26: #{tpu_custom_call.1} parent=1 // pred_check
      _
    $region27: #{tpu_custom_call.1} parent=1 // pred_check_branch
      %1359 = sbr.rel (0) target = $region29
    $region28: #{tpu_custom_call.1} parent=1 // pred_region
      %s1361 = ssub.s32 512, 512
      %1362 = vsyncadd [#allocation4], %s1361
      %s1363 = sshll.u32 [#allocation5], 4
      %s1364 = int_to_ptr.vmem [resolvable:$true] %s1363
      %1369 = dma.vmem_to_hbm [thread:$0]  %s1364, 512, %s5, [#allocation4], 128, 128, 8
    $region29: #{tpu_custom_call.1} parent=1 // pred_fallthru
      _
    // Predicated region
    $region30: #{tpu_custom_call.1} parent=1 // pred_check
      _
    $region31: #{tpu_custom_call.1} parent=1 // pred_check_branch
      %1371 = sbr.rel (0) target = $region33
    $region32: #{tpu_custom_call.1} parent=1 // pred_region
      %s1373 = ssub.s32 128, 128
      %1374 = vsyncadd [#allocation7], %s1373
      %s1376 = sshll.u32 [#allocation6], 4
      %s1377 = int_to_ptr.vmem [resolvable:$true] %s1376
      %1379 = dma.vmem_to_hbm [thread:$0]  %s1377, 128, %s6, [#allocation7]
    $region33: #{tpu_custom_call.1} parent=1 // pred_fallthru
      _
    // Predicated region
    $region34: #{tpu_custom_call.1} parent=1 // pred_check
      _
    $region35: #{tpu_custom_call.1} parent=1 // pred_check_branch
      %1381 = sbr.rel (0) target = $region37
    $region36: #{tpu_custom_call.1} parent=1 // pred_region
      %1382 = dma.done [#allocation4], 512
    $region37: #{tpu_custom_call.1} parent=1 // pred_fallthru
      _
    // Predicated region
    $region38: #{tpu_custom_call.1} parent=1 // pred_check
      _
    $region39: #{tpu_custom_call.1} parent=1 // pred_check_branch
      %1384 = sbr.rel (0) target = $region41
    $region40: #{tpu_custom_call.1} parent=1 // pred_region
      %1385 = dma.done [#allocation7], 128
    $region41: #{tpu_custom_call.1} parent=1 // pred_fallthru
      _
    %1386 = vsyncpa [#allocation3], 1
    %1387 = vsyncpa [#allocation4], 1
    %1388 = vsyncpa [#allocation7], 1

</llo_original>
